<compile_context>
chip_gen: v7x
topology: tpu7x:2x2x1
jax: 0.10.0
libtpu: 0.0.40
codegen_flags: <defaults>
</compile_context>

<pallas_src>
import math

import jax
import jax.numpy as jnp
import numpy as np
from jax.experimental import pallas as pl
from jax.experimental.pallas import tpu as pltpu
from jax.scipy.special import erf

# f32 HIGHEST only for the small fused kernels and the pure-JAX reference.
_PREC = jax.lax.Precision.HIGHEST

_ROW_TILE_CAP = 2048                      # row tile for (rows, features) kernels


def _tpu_vmem_bytes():
    try:
        info = pltpu.get_tpu_info()
        for name in ("vmem_capacity_bytes", "vmem_bytes", "vmem_size_bytes"):
            v = getattr(info, name, None)
            if v:
                return int(v)
    except Exception:
        pass
    return 64 * 1024 * 1024               # conservative default (v7x)


_PHYS_VMEM = _tpu_vmem_bytes()
if _PHYS_VMEM >= 128 * 1024 * 1024:       # v5e / v6e
    _DENSE_VMEM_LIMIT = 96 * 1024 * 1024
    _DENSE_BUDGET = 64 * 1024 * 1024
    _ROW_VMEM_LIMIT = 32 * 1024 * 1024
else:                                      # v7x: 64 MiB physical VMEM per core
    _DENSE_VMEM_LIMIT = 40 * 1024 * 1024
    _DENSE_BUDGET = 24 * 1024 * 1024
    _ROW_VMEM_LIMIT = 28 * 1024 * 1024


def _row_tile(rows, cap=_ROW_TILE_CAP):
    # full-extent block for small row counts (no masking, single grid step);
    # otherwise >= 2 grid steps (v7x megacore) with an 8-aligned tile <= cap.
    if rows <= 256:
        return rows
    half = ((rows + 1) // 2 + 7) // 8 * 8
    return min(cap, half)


def _dot(a, b):
    return jnp.dot(a, b, preferred_element_type=jnp.float32, precision=_PREC)


def _erf_approx(x):
    # Abramowitz & Stegun 7.1.26, |abs err| < 1.5e-7 — keeps exact-GELU in-kernel.
    a1, a2, a3, a4, a5 = (0.254829592, -0.284496736, 1.421413741,
                          -1.453152027, 1.061405429)
    p = 0.3275911
    s = jnp.where(x < 0.0, -1.0, 1.0)
    ax = jnp.abs(x)
    t = 1.0 / (1.0 + p * ax)
    poly = ((((a5 * t + a4) * t + a3) * t + a2) * t + a1) * t
    return s * (1.0 - poly * jnp.exp(-ax * ax))


def _gelu(x):
    return 0.5 * x * (1.0 + _erf_approx(x * (1.0 / math.sqrt(2.0))))


def _mlp_tail(h, g_ref, b_ref, w2_ref, o_ref):
    mu = jnp.mean(h, axis=-1, keepdims=True)
    var = jnp.mean(jnp.square(h - mu), axis=-1, keepdims=True)
    hn = (h - mu) * jax.lax.rsqrt(var + 1e-5)
    hn = hn * g_ref[...] + b_ref[...]
    o_ref[...] = _dot(_gelu(hn), w2_ref[...])


# ----------------------------- Pallas kernels -----------------------------

def _l34_kernel(c_ref, w3_ref, w4_ref, o3_ref, o4_ref):
    c = c_ref[...]
    o3_ref[...] = _dot(c, w3_ref[...]).astype(o3_ref.dtype)
    o4_ref[...] = _dot(c, w4_ref[...]).astype(o4_ref.dtype)


def edge_l34(C, w3, w4):
    """L3(C), L4(C) in one row-tiled pass over C; bf16 outputs feed the dense
    graph-matmul scatter directly (half the write bytes)."""
    E, Ce = C.shape
    TM = _row_tile(E)
    return pl.pallas_call(
        _l34_kernel,
        out_shape=(jax.ShapeDtypeStruct((E, Ce), jnp.bfloat16),
                   jax.ShapeDtypeStruct((E, Ce), jnp.bfloat16)),
        grid=(pl.cdiv(E, TM),),
        in_specs=[pl.BlockSpec((TM, Ce), lambda i: (i, 0)),
                  pl.BlockSpec((Ce, Ce), lambda i: (0, 0)),
                  pl.BlockSpec((Ce, Ce), lambda i: (0, 0))],
        out_specs=(pl.BlockSpec((TM, Ce), lambda i: (i, 0)),
                   pl.BlockSpec((TM, Ce), lambda i: (i, 0))),
        compiler_params=pltpu.CompilerParams(
            dimension_semantics=("parallel",),
            vmem_limit_bytes=_ROW_VMEM_LIMIT),
    )(C, w3, w4)


def _edge_mlp_kernel(c_ref, xg_ref, isd_ref, tmp_ref,
                     wl1_ref, wl2_ref, wl5_ref,
                     wa_ref, wb_ref, wc_ref, wd_ref,
                     g_ref, be_ref, w2_ref, o_ref):
    c = c_ref[...]
    l12 = _dot(c, wl1_ref[...]) * _dot(c, wl2_ref[...])           # L1C * L2C
    dg = _dot(xg_ref[...], wl5_ref[...]) * isd_ref[...]           # L5(x_i) * diag
    h = (_dot(c, wa_ref[...]) + _dot(l12, wb_ref[...]) +
         _dot(dg, wc_ref[...]) +
         _dot(tmp_ref[...].astype(jnp.float32), wd_ref[...]))     # == tmp @ We1
    _mlp_tail(h, g_ref, be_ref, w2_ref, o_ref)


def edge_mlp(C, xg, isd, tmp, wl1, wl2, wl5, we1, gamma, beta, we2):
    """L1/L2/L5 + hadamard + diag + Linear + LayerNorm + GELU + Linear fused,
    row-tiled over edges; We1 split into row blocks (no concatenated tmp)."""
    E, Ce = C.shape
    F = xg.shape[1]
    F5 = wl5.shape[1]
    H = we1.shape[1]
    O = we2.shape[1]
    wa = we1[:Ce]                       # rows for C
    wb = we1[Ce:2 * Ce]                 # rows for L1C*L2C
    wc = we1[2 * Ce:2 * Ce + F5]        # rows for tmp_diag
    wd = we1[2 * Ce + F5:]              # rows for tmp_matmul
    TM = _row_tile(E)
    return pl.pallas_call(
        _edge_mlp_kernel,
        out_shape=jax.ShapeDtypeStruct((E, O), jnp.float32),
        grid=(pl.cdiv(E, TM),),
        in_specs=[pl.BlockSpec((TM, Ce), lambda i: (i, 0)),
                  pl.BlockSpec((TM, F), lambda i: (i, 0)),
                  pl.BlockSpec((TM, 1), lambda i: (i, 0)),
                  pl.BlockSpec((TM, Ce), lambda i: (i, 0)),
                  pl.BlockSpec((Ce, Ce), lambda i: (0, 0)),
                  pl.BlockSpec((Ce, Ce), lambda i: (0, 0)),
                  pl.BlockSpec((F, F5), lambda i: (0, 0)),
                  pl.BlockSpec((Ce, H), lambda i: (0, 0)),
                  pl.BlockSpec((Ce, H), lambda i: (0, 0)),
                  pl.BlockSpec((F5, H), lambda i: (0, 0)),
                  pl.BlockSpec((Ce, H), lambda i: (0, 0)),
                  pl.BlockSpec((1, H), lambda i: (0, 0)),
                  pl.BlockSpec((1, H), lambda i: (0, 0)),
                  pl.BlockSpec((H, O), lambda i: (0, 0))],
        out_specs=pl.BlockSpec((TM, O), lambda i: (i, 0)),
        compiler_params=pltpu.CompilerParams(
            dimension_semantics=("parallel",),
            vmem_limit_bytes=_ROW_VMEM_LIMIT),
    )(C, xg, isd, tmp, wl1, wl2, wl5, wa, wb, wc, wd,
      gamma.reshape(1, -1), beta.reshape(1, -1), we2)


def _mlp1_kernel(x_ref, w1_ref, g_ref, b_ref, w2_ref, o_ref):
    _mlp_tail(_dot(x_ref[...], w1_ref[...]), g_ref, b_ref, w2_ref, o_ref)


def fused_mlp1(x, w1, gamma, beta, w2):
    """Linear + LayerNorm + GELU + Linear, fused, row-tiled (node MLP)."""
    R, D = x.shape
    H = w1.shape[1]
    O = w2.shape[1]
    TM = _row_tile(R)
    return pl.pallas_call(
        _mlp1_kernel,
        out_shape=jax.ShapeDtypeStruct((R, O), jnp.float32),
        grid=(pl.cdiv(R, TM),),
        in_specs=[pl.BlockSpec((TM, D), lambda i: (i, 0)),
                  pl.BlockSpec((D, H), lambda i: (0, 0)),
                  pl.BlockSpec((1, H), lambda i: (0, 0)),
                  pl.BlockSpec((1, H), lambda i: (0, 0)),
                  pl.BlockSpec((H, O), lambda i: (0, 0))],
        out_specs=pl.BlockSpec((TM, O), lambda i: (i, 0)),
        compiler_params=pltpu.CompilerParams(
            dimension_semantics=("parallel",),
            vmem_limit_bytes=_ROW_VMEM_LIMIT),
    )(x, w1, gamma.reshape(1, -1), beta.reshape(1, -1), w2)


def _bmm_kernel(a_ref, b_ref, o_ref):
    o_ref[...] = jnp.einsum(
        "cij,cjk->cik", a_ref[...], b_ref[...],
        preferred_element_type=jnp.float32).astype(o_ref.dtype)


def batched_matmul(a, b):
    """(M, N, N) @ (M, N, N) in bf16 with f32 accumulation; channel block is
    cb = min(cap, M) with a cdiv grid (masked tail), >= 2 steps for v7x."""
    M, N, _ = a.shape
    per_channel = 16 * N * N + 4096        # bf16 a/b/out double-buffered + f32 temp
    cb = max(1, min(M, _DENSE_BUDGET // per_channel))
    if M >= 2:
        cb = min(cb, (M + 1) // 2)         # keep both TensorCores busy on v7x
    return pl.pallas_call(
        _bmm_kernel,
        out_shape=jax.ShapeDtypeStruct((M, N, N), jnp.bfloat16),
        grid=(pl.cdiv(M, cb),),
        in_specs=[pl.BlockSpec((cb, N, N), lambda i: (i, 0, 0)),
                  pl.BlockSpec((cb, N, N), lambda i: (i, 0, 0))],
        out_specs=pl.BlockSpec((cb, N, N), lambda i: (i, 0, 0)),
        compiler_params=pltpu.CompilerParams(
            dimension_semantics=("parallel",),
            vmem_limit_bytes=_DENSE_VMEM_LIMIT),
    )(a, b)


def conv_agg_dense(adj, hdense, w_agg):
    """sum_k (adj[k, b] @ hdense[b]) @ w_agg[k]; grid = (graphs, K-tiles) with a
    VMEM accumulator over the (arbitrary) K axis; bf16 adjacency / features,
    f32 accumulation; the per-k loop replaced by two batched MXU einsums."""
    K, B, N, _ = adj.shape
    F = hdense.shape[-1]
    Fo = w_agg.shape[-1]

    per_k = 4 * N * N + 8 * N * F + 8 * N * Fo + 8 * F * Fo + 4096
    kb = max(1, min(K, _DENSE_BUDGET // per_k))
    kt = pl.cdiv(K, kb)
    k_pad = kb * kt
    if k_pad != K:                         # zero-pad K so no garbage enters the accumulator
        adj = jnp.pad(adj, ((0, k_pad - K), (0, 0), (0, 0), (0, 0)))
        w_agg = jnp.pad(w_agg, ((0, k_pad - K), (0, 0), (0, 0)))

    def kernel(a_ref, h_ref, w_ref, o_ref, acc_ref):
        @pl.when(pl.program_id(1) == 0)
        def _():
            acc_ref[...] = jnp.zeros_like(acc_ref)

        a = a_ref[...][:, 0]                                   # (kb, N, N) bf16
        h = h_ref[0]                                           # (N, F)     bf16
        hb = jnp.broadcast_to(h, (kb,) + h.shape)              # (kb, N, F)
        res = jnp.einsum("kij,kjf->kif", a, hb,
                         preferred_element_type=jnp.float32)   # (kb, N, F) f32
        outk = jnp.einsum("kif,kfo->kio", res, w_ref[...],
                          preferred_element_type=jnp.float32,
                          precision=_PREC)                     # (kb, N, Fo)
        acc_ref[...] += jnp.sum(outk, axis=0)

        @pl.when(pl.program_id(1) == pl.num_programs(1) - 1)
        def _():
            o_ref[0] = acc_ref[...]

    return pl.pallas_call(
        kernel,
        out_shape=jax.ShapeDtypeStruct((B, N, Fo), jnp.float32),
        grid=(B, kt),
        in_specs=[pl.BlockSpec((kb, 1, N, N), lambda b, k: (k, b, 0, 0)),
                  pl.BlockSpec((1, N, F), lambda b, k: (b, 0, 0)),
                  pl.BlockSpec((kb, F, Fo), lambda b, k: (k, 0, 0))],
        out_specs=pl.BlockSpec((1, N, Fo), lambda b, k: (b, 0, 0)),
        scratch_shapes=[pltpu.VMEM((N, Fo), jnp.float32)],
        compiler_params=pltpu.CompilerParams(
            dimension_semantics=("parallel", "arbitrary"),
            vmem_limit_bytes=_DENSE_VMEM_LIMIT),
    )(adj, hdense, w_agg)


# ----------------------------- G2N2 forward -----------------------------

def g2n2_forward(params, x, edge_index, node_index, C, batch_node, batch_edge,
                 num_node):
    B = int(num_node.shape[0])
    N = int(jnp.max(num_node))            # trace-time concretization (as in torch)
    E, Ce = C.shape
    F = x.shape[1]

    b_e = batch_edge
    i_loc = edge_index[1] - edge_index[0]
    j_loc = edge_index[2] - edge_index[0]
    n_loc = node_index[1] - node_index[0]

    xg = x[edge_index[1]]                                     # gather (index glue)
    is_diag = (edge_index[1] == edge_index[2]).astype(jnp.float32)[:, None]

    # ---- L3(C), L4(C) (bf16) ----
    L3C, L4C = edge_l34(C, params["W_l3"], params["W_l4"])

    # ---- matmul2(L3C, L4C): per-channel dense graph matmul (bf16 operands) ----
    # TODO(synk): sparse->dense scatter / dense->sparse gather of the edge and
    # node index lists stays in XLA; a scalar-prefetch scatter/gather kernel
    # would remove the remaining HBM round trips of rx/ry/prod/adj/hdense.
    rx = jnp.zeros((B, Ce, N, N), jnp.bfloat16).at[b_e, :, i_loc, j_loc].set(L3C)
    ry = jnp.zeros((B, Ce, N, N), jnp.bfloat16).at[b_e, :, i_loc, j_loc].set(L4C)
    prod = batched_matmul(rx.reshape(B * Ce, N, N), ry.reshape(B * Ce, N, N))
    tmp_matmul = prod.reshape(B, Ce, N, N)[b_e, :, i_loc, j_loc]   # (E, Ce) bf16

    # ---- fused edge MLP (L1/L2/L5 + diag + Linear/LN/GELU/Linear) ----
    Cout = edge_mlp(C, xg, is_diag, tmp_matmul,
                    params["W_l1"], params["W_l2"], params["W_l5"],
                    params["We1"], params["gamma_e"], params["beta_e"],
                    params["We2"])

    # ---- Conv_agg (K = nedgeoutput, bias=False), bf16 dense operands ----
    K = Cout.shape[1]
    adj = jnp.zeros((K, B, N, N), jnp.bfloat16).at[:, b_e, i_loc, j_loc].set(
        Cout.astype(jnp.bfloat16).T)
    hdense = jnp.zeros((B, N, F), jnp.bfloat16).at[batch_node, n_loc].set(
        x.astype(jnp.bfloat16))
    agg_dense = conv_agg_dense(adj, hdense, params["W_agg"])      # (B, N, Fo) f32
    agg_out = agg_dense[batch_node, n_loc]                        # (num_nodes, Fo)

    # ---- node MLP (fused, f32) ----
    xout = fused_mlp1(agg_out, params["Wn1"], params["gamma_n"],
                      params["beta_n"], params["Wn2"])
    return xout, Cout


# ----------------------------- reference (pure JAX, f32 HIGHEST) -----------------------------

def reference_forward(params, x, edge_index, node_index, C, batch_node,
                      batch_edge, num_node):
    B = int(num_node.shape[0])
    N = int(jnp.max(num_node))
    E, Ce = C.shape
    F = x.shape[1]
    b_e = batch_edge
    i_loc = edge_index[1] - edge_index[0]
    j_loc = edge_index[2] - edge_index[0]
    n_loc = node_index[1] - node_index[0]

    def mm(a, b):
        return jnp.matmul(a, b, precision=_PREC)

    def layernorm(v, g, b):
        mu = v.mean(-1, keepdims=True)
        var = ((v - mu) ** 2).mean(-1, keepdims=True)
        return (v - mu) / jnp.sqrt(var + 1e-5) * g + b

    def gelu(v):
        return 0.5 * v * (1.0 + erf(v / math.sqrt(2.0)))

    L5x = mm(x, params["W_l5"])
    is_diag = (edge_index[1] == edge_index[2]).astype(jnp.float32)[:, None]
    tmp_diag = L5x[edge_index[1]] * is_diag
    L3C = mm(C, params["W_l3"])
    L4C = mm(C, params["W_l4"])
    rx = jnp.zeros((B, Ce, N, N), jnp.float32).at[b_e, :, i_loc, j_loc].set(L3C)
    ry = jnp.zeros((B, Ce, N, N), jnp.float32).at[b_e, :, i_loc, j_loc].set(L4C)
    prod = jnp.einsum("bcij,bcjk->bcik", rx, ry, precision=_PREC)
    tmp_matmul = prod[b_e, :, i_loc, j_loc]
    tmp = jnp.concatenate(
        [C, mm(C, params["W_l1"]) * mm(C, params["W_l2"]), tmp_diag, tmp_matmul],
        axis=1)
    Cout = mm(gelu(layernorm(mm(tmp, params["We1"]), params["gamma_e"],
                             params["beta_e"])), params["We2"])
    K = Cout.shape[1]
    adj = jnp.zeros((K, B, N, N), jnp.float32).at[:, b_e, i_loc, j_loc].set(Cout.T)
    hdense = jnp.zeros((B, N, F), jnp.float32).at[batch_node, n_loc].set(x)
    res = jnp.einsum("kbij,bjf->kbif", adj, hdense, precision=_PREC)
    res = res[:, batch_node, n_loc, :]
    agg_out = jnp.einsum("knf,kfo->kno", res, params["W_agg"],
                         precision=_PREC).sum(0)
    xout = mm(gelu(layernorm(mm(agg_out, params["Wn1"]), params["gamma_n"],
                             params["beta_n"])), params["Wn2"])
    return xout, Cout


# ----------------------------- params & data -----------------------------

def glorot_init(key, shape):
    stdv = math.sqrt(6.0 / (shape[-2] + shape[-1]))
    return jax.random.uniform(key, shape, jnp.float32, minval=-stdv, maxval=stdv)


def init_params(key, nedgeinput, nedgeoutput, nnodeinput, nnodeoutput):
    F5 = max(nnodeinput, nedgeinput)
    ks = jax.random.split(key, 10)
    return dict(
        W_l1=glorot_init(ks[0], (nedgeinput, nedgeinput)),
        W_l2=glorot_init(ks[1], (nedgeinput, nedgeinput)),
        W_l3=glorot_init(ks[2], (nedgeinput, nedgeinput)),
        W_l4=glorot_init(ks[3], (nedgeinput, nedgeinput)),
        W_l5=glorot_init(ks[4], (nnodeinput, F5)),
        We1=glorot_init(ks[5], (3 * nedgeinput + F5, 4 * nedgeinput)),
        gamma_e=jnp.ones((4 * nedgeinput,), jnp.float32),
        beta_e=jnp.zeros((4 * nedgeinput,), jnp.float32),
        We2=glorot_init(ks[6], (4 * nedgeinput, nedgeoutput)),
        Wn1=glorot_init(ks[7], (nnodeinput, 4 * nnodeinput)),
        gamma_n=jnp.ones((4 * nnodeinput,), jnp.float32),
        beta_n=jnp.zeros((4 * nnodeinput,), jnp.float32),
        Wn2=glorot_init(ks[8], (4 * nnodeinput, nnodeoutput)),
        W_agg=glorot_init(ks[9], (nedgeoutput, nnodeinput, nnodeinput)),
    )


if __name__ == "__main__":
    nedgeinput, nedgeoutput = 4, 6
    nnodeinput, nnodeoutput = 5, 7

    # two graphs with 4 and 6 nodes; edges = all (i, j) pairs within each graph
    num_node_np = np.array([4, 6], dtype=np.int32)
    offsets = np.array([0, 4], dtype=np.int32)
    num_nodes = int(num_node_np.sum())

    node_index_np = np.zeros((2, num_nodes), dtype=np.int32)
    batch_node_np = np.zeros((num_nodes,), dtype=np.int32)
    c = 0
    for g in range(len(num_node_np)):
        for i in range(num_node_np[g]):
            node_index_np[0, c] = offsets[g]
            node_index_np[1, c] = offsets[g] + i
            batch_node_np[c] = g
            c += 1

    edges, batch_edge_list = [], []
    for g in range(len(num_node_np)):
        for i in range(num_node_np[g]):
            for j in range(num_node_np[g]):
                edges.append((offsets[g], offsets[g] + i, offsets[g] + j))
                batch_edge_list.append(g)
    edge_index_np = np.array(edges, dtype=np.int32).T        # (3, E)
    batch_edge_np = np.array(batch_edge_list, dtype=np.int32)
    E = edge_index_np.shape[1]

    key = jax.random.PRNGKey(0)
    kx, kc, kp = jax.random.split(key, 3)
    x = jax.random.normal(kx, (num_nodes, nnodeinput), jnp.float32)
    C = jax.random.normal(kc, (E, nedgeinput), jnp.float32)
    params = init_params(kp, nedgeinput, nedgeoutput, nnodeinput, nnodeoutput)

    edge_index = jnp.asarray(edge_index_np)
    node_index = jnp.asarray(node_index_np)
    batch_node = jnp.asarray(batch_node_np)
    batch_edge = jnp.asarray(batch_edge_np)
    num_node = jnp.asarray(num_node_np)

    xout, Cout = g2n2_forward(params, x, edge_index, node_index, C,
                              batch_node, batch_edge, num_node)
    jax.block_until_ready((xout, Cout))

    assert xout.shape == (num_nodes, nnodeoutput)
    assert Cout.shape == (E, nedgeoutput)

    xref, Cref = reference_forward(params, x, edge_index, node_index, C,
                                   batch_node, batch_edge, num_node)
    # tolerance reflects the bf16 (f32-accumulated) dense graph-matmul / Conv_agg
    # path; the f32-HIGHEST reference is the exact module semantics.
    np.testing.assert_allclose(np.asarray(Cout), np.asarray(Cref),
                               rtol=7e-2, atol=7e-2)
    np.testing.assert_allclose(np.asarray(xout), np.asarray(xref),
                               rtol=7e-2, atol=7e-2)
    print("KERNEL_OK")
</pallas_src>

<mosaic_0001>
module attributes {stable_mosaic.version = 11 : i64} {
  func.func @_l34_kernel(%arg0: i32, %arg1: memref<52x4xf32, #tpu.memory_space<vmem>>, %arg2: memref<4x4xf32, #tpu.memory_space<vmem>>, %arg3: memref<4x4xf32, #tpu.memory_space<vmem>>, %arg4: memref<52x4xbf16, #tpu.memory_space<vmem>>, %arg5: memref<52x4xbf16, #tpu.memory_space<vmem>>) attributes {dimension_semantics = [#tpu.dimension_semantics<parallel>], iteration_bounds = array<i64: 1>, scalar_prefetch = 0 : i64, scratch_operands = 0 : i64, tpu.core_type = #tpu.core_type<tc>, window_params = [{transform_indices = @transform_0, window_bounds = array<i64: 52, 4>}, {pipeline_mode = #tpu.pipeline_mode<synchronous>, transform_indices = @transform_1, window_bounds = array<i64: 4, 4>}, {pipeline_mode = #tpu.pipeline_mode<synchronous>, transform_indices = @transform_2, window_bounds = array<i64: 4, 4>}, {transform_indices = @transform_3, window_bounds = array<i64: 52, 4>}, {transform_indices = @transform_4, window_bounds = array<i64: 52, 4>}]} {
    %c0 = arith.constant 0 : index
    %c0_0 = arith.constant 0 : index
    %0 = vector.load %arg1[%c0, %c0_0] : memref<52x4xf32, #tpu.memory_space<vmem>>, vector<52x4xf32>
    %c0_1 = arith.constant 0 : index
    %c0_2 = arith.constant 0 : index
    %1 = vector.load %arg2[%c0_1, %c0_2] : memref<4x4xf32, #tpu.memory_space<vmem>>, vector<4x4xf32>
    %cst = arith.constant dense<0.000000e+00> : vector<52x4xf32>
    %2 = tpu.matmul %0, %1, %cst {dimension_numbers = #tpu.dot_dimension_numbers<[1], [0], [0], [1], [0, 0, 1, 1], [], []>, precision = #tpu.contract_precision<fp32>} : vector<52x4xf32>, vector<4x4xf32>, vector<52x4xf32> -> vector<52x4xf32>
    %3 = arith.truncf %2 : vector<52x4xf32> to vector<52x4xbf16>
    %c0_3 = arith.constant 0 : index
    %c0_4 = arith.constant 0 : index
    %4 = vector.load %arg4[%c0_3, %c0_4] : memref<52x4xbf16, #tpu.memory_space<vmem>>, vector<52x4xbf16>
    tpu.vector_store %arg4[%c0_3, %c0_4], %3 {strides = array<i32>} : memref<52x4xbf16, #tpu.memory_space<vmem>>, vector<52x4xbf16>,
    %c0_5 = arith.constant 0 : index
    %c0_6 = arith.constant 0 : index
    %5 = vector.load %arg3[%c0_5, %c0_6] : memref<4x4xf32, #tpu.memory_space<vmem>>, vector<4x4xf32>
    %cst_7 = arith.constant dense<0.000000e+00> : vector<52x4xf32>
    %6 = tpu.matmul %0, %5, %cst_7 {dimension_numbers = #tpu.dot_dimension_numbers<[1], [0], [0], [1], [0, 0, 1, 1], [], []>, precision = #tpu.contract_precision<fp32>} : vector<52x4xf32>, vector<4x4xf32>, vector<52x4xf32> -> vector<52x4xf32>
    %7 = arith.truncf %6 : vector<52x4xf32> to vector<52x4xbf16>
    %c0_8 = arith.constant 0 : index
    %c0_9 = arith.constant 0 : index
    %8 = vector.load %arg5[%c0_8, %c0_9] : memref<52x4xbf16, #tpu.memory_space<vmem>>, vector<52x4xbf16>
    tpu.vector_store %arg5[%c0_8, %c0_9], %7 {strides = array<i32>} : memref<52x4xbf16, #tpu.memory_space<vmem>>, vector<52x4xbf16>,
    return
  }
  func.func @transform_0(%arg0: i32) -> (i32, i32) {
    %c0_i32 = arith.constant 0 : i32
    %c0_i32_0 = arith.constant 0 : i32
    return %arg0, %c0_i32 : i32, i32
  }
  func.func @transform_1(%arg0: i32) -> (i32, i32) {
    %c0_i32 = arith.constant 0 : i32
    %c0_i32_0 = arith.constant 0 : i32
    %c0_i32_1 = arith.constant 0 : i32
    return %c0_i32, %c0_i32_0 : i32, i32
  }
  func.func @transform_2(%arg0: i32) -> (i32, i32) {
    %c0_i32 = arith.constant 0 : i32
    %c0_i32_0 = arith.constant 0 : i32
    %c0_i32_1 = arith.constant 0 : i32
    return %c0_i32, %c0_i32_0 : i32, i32
  }
  func.func @transform_3(%arg0: i32) -> (i32, i32) {
    %c0_i32 = arith.constant 0 : i32
    %c0_i32_0 = arith.constant 0 : i32
    return %arg0, %c0_i32 : i32, i32
  }
  func.func @transform_4(%arg0: i32) -> (i32, i32) {
    %c0_i32 = arith.constant 0 : i32
    %c0_i32_0 = arith.constant 0 : i32
    return %arg0, %c0_i32 : i32, i32
  }
}

</mosaic_0001>

<llo_original>
// kernel: tpu_custom_call.1
$region0: #{tpu_custom_call.1}
  #allocation0 [shape = 'u32[]', space=smem, size = 0x4, offset = 0x4, fixed_abs, tag = 'smem constant byte address 0x4 - core index']
  #allocation1 [shape = 'u32[144,128]{1,0:T(1,128)}', space=vmem, size = 0x12000, scoped, tag = 'internal scratch']
  %s0 = inlined_call_operand.vmem [shape: f32[52,4], index: 0, kind: input, shape index: {}]
  %s1 = inlined_call_operand.vmem [shape: f32[4,4], index: 1, kind: input, shape index: {}]
  %s2 = inlined_call_operand.vmem [shape: f32[4,4], index: 2, kind: input, shape index: {}]
  %s3 = inlined_call_operand.vmem [shape: bf16[52,4], index: 3, kind: output, shape index: {0}]
  %s4 = inlined_call_operand.vmem [shape: bf16[52,4], index: 4, kind: output, shape index: {1}]
  %5 = xla_tuple %s3, %s4
  %s6 = sld [smem:[#allocation0]]
  $region30: #{tpu_custom_call.1} parent=0
    _
  %s8 = ssub.s32 1, %s6
  %s9 = scalar_select 0, %s8, %s6
  // Predicated region
  $region2: #{tpu_custom_call.1} parent=0 // pred_check
    _
  $region3: #{tpu_custom_call.1} parent=0 // pred_check_branch
    %11 = sbr.rel (0) target = $region5
  $region4: #{tpu_custom_call.1} parent=0 // pred_region
    _
  $region5: #{tpu_custom_call.1} parent=0 // pred_fallthru
    _
  // Predicated region
  $region6: #{tpu_custom_call.1} parent=0 // pred_check
    _
  $region7: #{tpu_custom_call.1} parent=0 // pred_check_branch
    %13 = sbr.rel (0) target = $region9
  $region8: #{tpu_custom_call.1} parent=0 // pred_region
    _
  $region9: #{tpu_custom_call.1} parent=0 // pred_fallthru
    _
  // Predicated region
  $region10: #{tpu_custom_call.1} parent=0 // pred_check
    _
  $region11: #{tpu_custom_call.1} parent=0 // pred_check_branch
    %15 = sbr.rel (0) target = $region13
  $region12: #{tpu_custom_call.1} parent=0 // pred_region
    _
  $region13: #{tpu_custom_call.1} parent=0 // pred_fallthru
    _
  %v16 = vld [vmem:[%s0] sm:$0xff]
  %v17 = vld [vmem:[%s0 + $0x8] sm:$0xff]
  %v18 = vld [vmem:[%s0 + $0x10] sm:$0xff]
  %v19 = vld [vmem:[%s0 + $0x18] sm:$0xff]
  %v20 = vld [vmem:[%s0 + $0x20] sm:$0xff]
  %v21 = vld [vmem:[%s0 + $0x28] sm:$0xff]
  %v22 = vld [vmem:[%s0 + $0x30] sm:$0xf]
  %v23 = vld [vmem:[%s1] sm:$0xf]
  %vm24 = vcmask 31744
  %v26 = vsel %vm24, %v16, 0
  %v29 = vsel %vm24, %v17, 0
  %v32 = vsel %vm24, %v18, 0
  %v35 = vsel %vm24, %v19, 0
  %v38 = vsel %vm24, %v20, 0
  %v41 = vsel %vm24, %v21, 0
  %v44 = vsel %vm24, %v22, 0
  %vm46 = vcmask 1043456
  %v48 = vsel %vm46, %v23, 0
  %50 = vmatprep.subr.mxu0 0.0
  %v51 = vand.u32 %v48, 4294901760
  %52 = vmatpush1.msra.mxu0 %v51
  %53 = vmatprep.subr.mxu0 0.0
  %54 = vmatpush1.msra.mxu0 0.0
  %55 = vmatprep.subr.mxu0 0.0
  %56 = vmatpush1.msra.mxu0 0.0
  %57 = vmatprep.subr.mxu0 0.0
  %58 = vmatpush1.msra.mxu0 0.0
  %59 = vmatprep.subr.mxu0 0.0
  %60 = vmatpush1.msra.mxu0 0.0
  %61 = vmatprep.subr.mxu0 0.0
  %62 = vmatpush1.msra.mxu0 0.0
  %63 = vmatprep.subr.mxu0 0.0
  %64 = vmatpush1.msra.mxu0 0.0
  %65 = vmatprep.subr.mxu0 0.0
  %66 = vmatpush1.msra.mxu0 0.0
  %67 = vmatprep.subr.mxu0 0.0
  %68 = vmatpush1.msra.mxu0 0.0
  %69 = vmatprep.subr.mxu0 0.0
  %70 = vmatpush1.msra.mxu0 0.0
  %71 = vmatprep.subr.mxu0 0.0
  %72 = vmatpush1.msra.mxu0 0.0
  %73 = vmatprep.subr.mxu0 0.0
  %74 = vmatpush1.msra.mxu0 0.0
  %75 = vmatprep.subr.mxu0 0.0
  %76 = vmatpush1.msra.mxu0 0.0
  %77 = vmatprep.subr.mxu0 0.0
  %78 = vmatpush1.msra.mxu0 0.0
  %79 = vmatprep.subr.mxu0 0.0
  %80 = vmatpush1.msra.mxu0 0.0
  %81 = vmatprep.subr.mxu0 0.0
  %82 = vmatpush1.msra.mxu0 0.0
  %83 = vmatprep.subr.mxu0 0.0
  %84 = vmatpush1.msra.mxu0 0.0
  %85 = vmatprep.subr.mxu0 0.0
  %86 = vmatpush1.msra.mxu0 0.0
  %87 = vmatprep.subr.mxu0 0.0
  %88 = vmatpush1.msra.mxu0 0.0
  %89 = vmatprep.subr.mxu0 0.0
  %90 = vmatpush1.msra.mxu0 0.0
  %91 = vmatprep.subr.mxu0 0.0
  %92 = vmatpush1.msra.mxu0 0.0
  %93 = vmatprep.subr.mxu0 0.0
  %94 = vmatpush1.msra.mxu0 0.0
  %95 = vmatprep.subr.mxu0 0.0
  %96 = vmatpush1.msra.mxu0 0.0
  %97 = vmatprep.subr.mxu0 0.0
  %98 = vmatpush1.msra.mxu0 0.0
  %99 = vmatprep.subr.mxu0 0.0
  %100 = vmatpush1.msra.mxu0 0.0
  %101 = vmatprep.subr.mxu0 0.0
  %102 = vmatpush1.msra.mxu0 0.0
  %103 = vmatprep.subr.mxu0 0.0
  %104 = vmatpush1.msra.mxu0 0.0
  %105 = vmatprep.subr.mxu0 0.0
  %106 = vmatpush1.msra.mxu0 0.0
  %107 = vmatprep.subr.mxu0 0.0
  %108 = vmatpush1.msra.mxu0 0.0
  %109 = vmatprep.subr.mxu0 0.0
  %110 = vmatpush1.msra.mxu0 0.0
  %111 = vmatprep.subr.mxu0 0.0
  %112 = vmatpush1.msra.mxu0 0.0
  %113 = vmatprep.subr.mxu0 0.0
  %114 = vmatpush1.msra.mxu0 0.0
  %115 = vmatprep.mubr.f32.mxu0 0.0
  %v116 = vand.u32 %v26, 4294901760
  %v117 = vsub.f32 %v26, %v116
  %v118 = vand.u32 %v117, 4294901760
  %v119 = vsub.f32 %v117, %v118
  %v120 = vand.u32 %v119, 4294901760
  %121 = vmatmul.mubr.f32.gmra.mrb[0].mxu0 %v120
  %v122 = vpop.f32.mrb[0].mxu0
  %v123 = vadd.f32 0.0, %v122
  %v124 = vpop.f32.mrb[0].mxu0
  %125 = vmatprep.mubr.f32.mxu0 0.0
  %v126 = vand.u32 %v29, 4294901760
  %v127 = vsub.f32 %v29, %v126
  %v128 = vand.u32 %v127, 4294901760
  %v129 = vsub.f32 %v127, %v128
  %v130 = vand.u32 %v129, 4294901760
  %131 = vmatmul.mubr.f32.gmra.mrb[0].mxu0 %v130
  %v132 = vpop.f32.mrb[0].mxu0
  %v133 = vadd.f32 0.0, %v132
  %v134 = vpop.f32.mrb[0].mxu0
  %135 = vmatprep.mubr.f32.mxu0 0.0
  %v136 = vand.u32 %v32, 4294901760
  %v137 = vsub.f32 %v32, %v136
  %v138 = vand.u32 %v137, 4294901760
  %v139 = vsub.f32 %v137, %v138
  %v140 = vand.u32 %v139, 4294901760
  %141 = vmatmul.mubr.f32.gmra.mrb[0].mxu0 %v140
  %v142 = vpop.f32.mrb[0].mxu0
  %v143 = vadd.f32 0.0, %v142
  %v144 = vpop.f32.mrb[0].mxu0
  %145 = vmatprep.mubr.f32.mxu0 0.0
  %v146 = vand.u32 %v35, 4294901760
  %v147 = vsub.f32 %v35, %v146
  %v148 = vand.u32 %v147, 4294901760
  %v149 = vsub.f32 %v147, %v148
  %v150 = vand.u32 %v149, 4294901760
  %151 = vmatmul.mubr.f32.gmra.mrb[0].mxu0 %v150
  %v152 = vpop.f32.mrb[0].mxu0
  %v153 = vadd.f32 0.0, %v152
  %v154 = vpop.f32.mrb[0].mxu0
  %155 = vmatprep.mubr.f32.mxu0 0.0
  %v156 = vand.u32 %v38, 4294901760
  %v157 = vsub.f32 %v38, %v156
  %v158 = vand.u32 %v157, 4294901760
  %v159 = vsub.f32 %v157, %v158
  %v160 = vand.u32 %v159, 4294901760
  %161 = vmatmul.mubr.f32.gmra.mrb[0].mxu0 %v160
  %v162 = vpop.f32.mrb[0].mxu0
  %v163 = vadd.f32 0.0, %v162
  %v164 = vpop.f32.mrb[0].mxu0
  %165 = vmatprep.mubr.f32.mxu0 0.0
  %v166 = vand.u32 %v41, 4294901760
  %v167 = vsub.f32 %v41, %v166
  %v168 = vand.u32 %v167, 4294901760
  %v169 = vsub.f32 %v167, %v168
  %v170 = vand.u32 %v169, 4294901760
  %171 = vmatmul.mubr.f32.gmra.mrb[0].mxu0 %v170
  %v172 = vpop.f32.mrb[0].mxu0
  %v173 = vadd.f32 0.0, %v172
  %v174 = vpop.f32.mrb[0].mxu0
  %175 = vmatprep.mubr.f32.mxu0 0.0
  %v176 = vand.u32 %v44, 4294901760
  %v177 = vsub.f32 %v44, %v176
  %v178 = vand.u32 %v177, 4294901760
  %v179 = vsub.f32 %v177, %v178
  %v180 = vand.u32 %v179, 4294901760
  %181 = vmatmul.mubr.f32.gmra.mrb[0].mxu0 %v180
  %v182 = vpop.f32.mrb[0].mxu0
  %v183 = vadd.f32 0.0, %v182
  %v184 = vpop.f32.mrb[0].mxu0
  %185 = vdwg.mxu0
  %186 = vmatprep.subr.mxu0 0.0
  %v187 = vand.u32 %v48, 4294901760
  %v188 = vsub.f32 %v48, %v187
  %v189 = vand.u32 %v188, 4294901760
  %v190 = vsub.f32 %v188, %v189
  %v191 = vand.u32 %v190, 4294901760
  %192 = vmatpush1.msra.mxu0 %v191
  %193 = vmatprep.subr.mxu0 0.0
  %194 = vmatpush1.msra.mxu0 0.0
  %195 = vmatprep.subr.mxu0 0.0
  %196 = vmatpush1.msra.mxu0 0.0
  %197 = vmatprep.subr.mxu0 0.0
  %198 = vmatpush1.msra.mxu0 0.0
  %199 = vmatprep.subr.mxu0 0.0
  %200 = vmatpush1.msra.mxu0 0.0
  %201 = vmatprep.subr.mxu0 0.0
  %202 = vmatpush1.msra.mxu0 0.0
  %203 = vmatprep.subr.mxu0 0.0
  %204 = vmatpush1.msra.mxu0 0.0
  %205 = vmatprep.subr.mxu0 0.0
  %206 = vmatpush1.msra.mxu0 0.0
  %207 = vmatprep.subr.mxu0 0.0
  %208 = vmatpush1.msra.mxu0 0.0
  %209 = vmatprep.subr.mxu0 0.0
  %210 = vmatpush1.msra.mxu0 0.0
  %211 = vmatprep.subr.mxu0 0.0
  %212 = vmatpush1.msra.mxu0 0.0
  %213 = vmatprep.subr.mxu0 0.0
  %214 = vmatpush1.msra.mxu0 0.0
  %215 = vmatprep.subr.mxu0 0.0
  %216 = vmatpush1.msra.mxu0 0.0
  %217 = vmatprep.subr.mxu0 0.0
  %218 = vmatpush1.msra.mxu0 0.0
  %219 = vmatprep.subr.mxu0 0.0
  %220 = vmatpush1.msra.mxu0 0.0
  %221 = vmatprep.subr.mxu0 0.0
  %222 = vmatpush1.msra.mxu0 0.0
  %223 = vmatprep.subr.mxu0 0.0
  %224 = vmatpush1.msra.mxu0 0.0
  %225 = vmatprep.subr.mxu0 0.0
  %226 = vmatpush1.msra.mxu0 0.0
  %227 = vmatprep.subr.mxu0 0.0
  %228 = vmatpush1.msra.mxu0 0.0
  %229 = vmatprep.subr.mxu0 0.0
  %230 = vmatpush1.msra.mxu0 0.0
  %231 = vmatprep.subr.mxu0 0.0
  %232 = vmatpush1.msra.mxu0 0.0
  %233 = vmatprep.subr.mxu0 0.0
  %234 = vmatpush1.msra.mxu0 0.0
  %235 = vmatprep.subr.mxu0 0.0
  %236 = vmatpush1.msra.mxu0 0.0
  %237 = vmatprep.subr.mxu0 0.0
  %238 = vmatpush1.msra.mxu0 0.0
  %239 = vmatprep.subr.mxu0 0.0
  %240 = vmatpush1.msra.mxu0 0.0
  %241 = vmatprep.subr.mxu0 0.0
  %242 = vmatpush1.msra.mxu0 0.0
  %243 = vmatprep.subr.mxu0 0.0
  %244 = vmatpush1.msra.mxu0 0.0
  %245 = vmatprep.subr.mxu0 0.0
  %246 = vmatpush1.msra.mxu0 0.0
  %247 = vmatprep.subr.mxu0 0.0
  %248 = vmatpush1.msra.mxu0 0.0
  %249 = vmatprep.subr.mxu0 0.0
  %250 = vmatpush1.msra.mxu0 0.0
  %251 = vmatprep.subr.mxu0 0.0
  %252 = vmatpush1.msra.mxu0 0.0
  %253 = vmatprep.subr.mxu0 0.0
  %254 = vmatpush1.msra.mxu0 0.0
  %255 = vmatprep.mubr.f32.mxu0 0.0
  %v256 = vand.u32 %v26, 4294901760
  %257 = vmatmul.mubr.f32.gmra.mrb[0].mxu0 %v256
  %v258 = vpop.f32.mrb[0].mxu0
  %v259 = vadd.f32 %v123, %v258
  %v260 = vpop.f32.mrb[0].mxu0
  %261 = vmatprep.mubr.f32.mxu0 0.0
  %v262 = vand.u32 %v29, 4294901760
  %263 = vmatmul.mubr.f32.gmra.mrb[0].mxu0 %v262
  %v264 = vpop.f32.mrb[0].mxu0
  %v265 = vadd.f32 %v133, %v264
  %v266 = vpop.f32.mrb[0].mxu0
  %267 = vmatprep.mubr.f32.mxu0 0.0
  %v268 = vand.u32 %v32, 4294901760
  %269 = vmatmul.mubr.f32.gmra.mrb[0].mxu0 %v268
  %v270 = vpop.f32.mrb[0].mxu0
  %v271 = vadd.f32 %v143, %v270
  %v272 = vpop.f32.mrb[0].mxu0
  %273 = vmatprep.mubr.f32.mxu0 0.0
  %v274 = vand.u32 %v35, 4294901760
  %275 = vmatmul.mubr.f32.gmra.mrb[0].mxu0 %v274
  %v276 = vpop.f32.mrb[0].mxu0
  %v277 = vadd.f32 %v153, %v276
  %v278 = vpop.f32.mrb[0].mxu0
  %279 = vmatprep.mubr.f32.mxu0 0.0
  %v280 = vand.u32 %v38, 4294901760
  %281 = vmatmul.mubr.f32.gmra.mrb[0].mxu0 %v280
  %v282 = vpop.f32.mrb[0].mxu0
  %v283 = vadd.f32 %v163, %v282
  %v284 = vpop.f32.mrb[0].mxu0
  %285 = vmatprep.mubr.f32.mxu0 0.0
  %v286 = vand.u32 %v41, 4294901760
  %287 = vmatmul.mubr.f32.gmra.mrb[0].mxu0 %v286
  %v288 = vpop.f32.mrb[0].mxu0
  %v289 = vadd.f32 %v173, %v288
  %v290 = vpop.f32.mrb[0].mxu0
  %291 = vmatprep.mubr.f32.mxu0 0.0
  %v292 = vand.u32 %v44, 4294901760
  %293 = vmatmul.mubr.f32.gmra.mrb[0].mxu0 %v292
  %v294 = vpop.f32.mrb[0].mxu0
  %v295 = vadd.f32 %v183, %v294
  %v296 = vpop.f32.mrb[0].mxu0
  %297 = vdwg.mxu0
  %298 = vmatprep.subr.mxu0 0.0
  %v299 = vand.u32 %v48, 4294901760
  %v300 = vsub.f32 %v48, %v299
  %301 = vmatpush1.msra.mxu0 %v300
  %302 = vmatprep.subr.mxu0 0.0
  %303 = vmatpush1.msra.mxu0 0.0
  %304 = vmatprep.subr.mxu0 0.0
  %305 = vmatpush1.msra.mxu0 0.0
  %306 = vmatprep.subr.mxu0 0.0
  %307 = vmatpush1.msra.mxu0 0.0
  %308 = vmatprep.subr.mxu0 0.0
  %309 = vmatpush1.msra.mxu0 0.0
  %310 = vmatprep.subr.mxu0 0.0
  %311 = vmatpush1.msra.mxu0 0.0
  %312 = vmatprep.subr.mxu0 0.0
  %313 = vmatpush1.msra.mxu0 0.0
  %314 = vmatprep.subr.mxu0 0.0
  %315 = vmatpush1.msra.mxu0 0.0
  %316 = vmatprep.subr.mxu0 0.0
  %317 = vmatpush1.msra.mxu0 0.0
  %318 = vmatprep.subr.mxu0 0.0
  %319 = vmatpush1.msra.mxu0 0.0
  %320 = vmatprep.subr.mxu0 0.0
  %321 = vmatpush1.msra.mxu0 0.0
  %322 = vmatprep.subr.mxu0 0.0
  %323 = vmatpush1.msra.mxu0 0.0
  %324 = vmatprep.subr.mxu0 0.0
  %325 = vmatpush1.msra.mxu0 0.0
  %326 = vmatprep.subr.mxu0 0.0
  %327 = vmatpush1.msra.mxu0 0.0
  %328 = vmatprep.subr.mxu0 0.0
  %329 = vmatpush1.msra.mxu0 0.0
  %330 = vmatprep.subr.mxu0 0.0
  %331 = vmatpush1.msra.mxu0 0.0
  %332 = vmatprep.subr.mxu0 0.0
  %333 = vmatpush1.msra.mxu0 0.0
  %334 = vmatprep.subr.mxu0 0.0
  %335 = vmatpush1.msra.mxu0 0.0
  %336 = vmatprep.subr.mxu0 0.0
  %337 = vmatpush1.msra.mxu0 0.0
  %338 = vmatprep.subr.mxu0 0.0
  %339 = vmatpush1.msra.mxu0 0.0
  %340 = vmatprep.subr.mxu0 0.0
  %341 = vmatpush1.msra.mxu0 0.0
  %342 = vmatprep.subr.mxu0 0.0
  %343 = vmatpush1.msra.mxu0 0.0
  %344 = vmatprep.subr.mxu0 0.0
  %345 = vmatpush1.msra.mxu0 0.0
  %346 = vmatprep.subr.mxu0 0.0
  %347 = vmatpush1.msra.mxu0 0.0
  %348 = vmatprep.subr.mxu0 0.0
  %349 = vmatpush1.msra.mxu0 0.0
  %350 = vmatprep.subr.mxu0 0.0
  %351 = vmatpush1.msra.mxu0 0.0
  %352 = vmatprep.subr.mxu0 0.0
  %353 = vmatpush1.msra.mxu0 0.0
  %354 = vmatprep.subr.mxu0 0.0
  %355 = vmatpush1.msra.mxu0 0.0
  %356 = vmatprep.subr.mxu0 0.0
  %357 = vmatpush1.msra.mxu0 0.0
  %358 = vmatprep.subr.mxu0 0.0
  %359 = vmatpush1.msra.mxu0 0.0
  %360 = vmatprep.subr.mxu0 0.0
  %361 = vmatpush1.msra.mxu0 0.0
  %362 = vmatprep.subr.mxu0 0.0
  %363 = vmatpush1.msra.mxu0 0.0
  %364 = vmatprep.mubr.f32.mxu0 0.0
  %v365 = vand.u32 %v26, 4294901760
  %v366 = vsub.f32 %v26, %v365
  %367 = vmatmul.mubr.f32.gmra.mrb[0].mxu0 %v366
  %v368 = vpop.f32.mrb[0].mxu0
  %v369 = vadd.f32 %v259, %v368
  %v370 = vpop.f32.mrb[0].mxu0
  %371 = vmatprep.mubr.f32.mxu0 0.0
  %v372 = vand.u32 %v29, 4294901760
  %v373 = vsub.f32 %v29, %v372
  %374 = vmatmul.mubr.f32.gmra.mrb[0].mxu0 %v373
  %v375 = vpop.f32.mrb[0].mxu0
  %v376 = vadd.f32 %v265, %v375
  %v377 = vpop.f32.mrb[0].mxu0
  %378 = vmatprep.mubr.f32.mxu0 0.0
  %v379 = vand.u32 %v32, 4294901760
  %v380 = vsub.f32 %v32, %v379
  %381 = vmatmul.mubr.f32.gmra.mrb[0].mxu0 %v380
  %v382 = vpop.f32.mrb[0].mxu0
  %v383 = vadd.f32 %v271, %v382
  %v384 = vpop.f32.mrb[0].mxu0
  %385 = vmatprep.mubr.f32.mxu0 0.0
  %v386 = vand.u32 %v35, 4294901760
  %v387 = vsub.f32 %v35, %v386
  %388 = vmatmul.mubr.f32.gmra.mrb[0].mxu0 %v387
  %v389 = vpop.f32.mrb[0].mxu0
  %v390 = vadd.f32 %v277, %v389
  %v391 = vpop.f32.mrb[0].mxu0
  %392 = vmatprep.mubr.f32.mxu0 0.0
  %v393 = vand.u32 %v38, 4294901760
  %v394 = vsub.f32 %v38, %v393
  %395 = vmatmul.mubr.f32.gmra.mrb[0].mxu0 %v394
  %v396 = vpop.f32.mrb[0].mxu0
  %v397 = vadd.f32 %v283, %v396
  %v398 = vpop.f32.mrb[0].mxu0
  %399 = vmatprep.mubr.f32.mxu0 0.0
  %v400 = vand.u32 %v41, 4294901760
  %v401 = vsub.f32 %v41, %v400
  %402 = vmatmul.mubr.f32.gmra.mrb[0].mxu0 %v401
  %v403 = vpop.f32.mrb[0].mxu0
  %v404 = vadd.f32 %v289, %v403
  %v405 = vpop.f32.mrb[0].mxu0
  %406 = vmatprep.mubr.f32.mxu0 0.0
  %v407 = vand.u32 %v44, 4294901760
  %v408 = vsub.f32 %v44, %v407
  %409 = vmatmul.mubr.f32.gmra.mrb[0].mxu0 %v408
  %v410 = vpop.f32.mrb[0].mxu0
  %v411 = vadd.f32 %v295, %v410
  %v412 = vpop.f32.mrb[0].mxu0
  %413 = vdwg.mxu0
  %414 = vmatprep.subr.mxu0 0.0
  %v415 = vand.u32 %v48, 4294901760
  %416 = vmatpush1.msra.mxu0 %v415
  %417 = vmatprep.subr.mxu0 0.0
  %418 = vmatpush1.msra.mxu0 0.0
  %419 = vmatprep.subr.mxu0 0.0
  %420 = vmatpush1.msra.mxu0 0.0
  %421 = vmatprep.subr.mxu0 0.0
  %422 = vmatpush1.msra.mxu0 0.0
  %423 = vmatprep.subr.mxu0 0.0
  %424 = vmatpush1.msra.mxu0 0.0
  %425 = vmatprep.subr.mxu0 0.0
  %426 = vmatpush1.msra.mxu0 0.0
  %427 = vmatprep.subr.mxu0 0.0
  %428 = vmatpush1.msra.mxu0 0.0
  %429 = vmatprep.subr.mxu0 0.0
  %430 = vmatpush1.msra.mxu0 0.0
  %431 = vmatprep.subr.mxu0 0.0
  %432 = vmatpush1.msra.mxu0 0.0
  %433 = vmatprep.subr.mxu0 0.0
  %434 = vmatpush1.msra.mxu0 0.0
  %435 = vmatprep.subr.mxu0 0.0
  %436 = vmatpush1.msra.mxu0 0.0
  %437 = vmatprep.subr.mxu0 0.0
  %438 = vmatpush1.msra.mxu0 0.0
  %439 = vmatprep.subr.mxu0 0.0
  %440 = vmatpush1.msra.mxu0 0.0
  %441 = vmatprep.subr.mxu0 0.0
  %442 = vmatpush1.msra.mxu0 0.0
  %443 = vmatprep.subr.mxu0 0.0
  %444 = vmatpush1.msra.mxu0 0.0
  %445 = vmatprep.subr.mxu0 0.0
  %446 = vmatpush1.msra.mxu0 0.0
  %447 = vmatprep.subr.mxu0 0.0
  %448 = vmatpush1.msra.mxu0 0.0
  %449 = vmatprep.subr.mxu0 0.0
  %450 = vmatpush1.msra.mxu0 0.0
  %451 = vmatprep.subr.mxu0 0.0
  %452 = vmatpush1.msra.mxu0 0.0
  %453 = vmatprep.subr.mxu0 0.0
  %454 = vmatpush1.msra.mxu0 0.0
  %455 = vmatprep.subr.mxu0 0.0
  %456 = vmatpush1.msra.mxu0 0.0
  %457 = vmatprep.subr.mxu0 0.0
  %458 = vmatpush1.msra.mxu0 0.0
  %459 = vmatprep.subr.mxu0 0.0
  %460 = vmatpush1.msra.mxu0 0.0
  %461 = vmatprep.subr.mxu0 0.0
  %462 = vmatpush1.msra.mxu0 0.0
  %463 = vmatprep.subr.mxu0 0.0
  %464 = vmatpush1.msra.mxu0 0.0
  %465 = vmatprep.subr.mxu0 0.0
  %466 = vmatpush1.msra.mxu0 0.0
  %467 = vmatprep.subr.mxu0 0.0
  %468 = vmatpush1.msra.mxu0 0.0
  %469 = vmatprep.subr.mxu0 0.0
  %470 = vmatpush1.msra.mxu0 0.0
  %471 = vmatprep.subr.mxu0 0.0
  %472 = vmatpush1.msra.mxu0 0.0
  %473 = vmatprep.subr.mxu0 0.0
  %474 = vmatpush1.msra.mxu0 0.0
  %475 = vmatprep.subr.mxu0 0.0
  %476 = vmatpush1.msra.mxu0 0.0
  %477 = vmatprep.subr.mxu0 0.0
  %478 = vmatpush1.msra.mxu0 0.0
  %479 = vmatprep.mubr.f32.mxu0 0.0
  %v480 = vand.u32 %v26, 4294901760
  %v481 = vsub.f32 %v26, %v480
  %v482 = vand.u32 %v481, 4294901760
  %483 = vmatmul.mubr.f32.gmra.mrb[0].mxu0 %v482
  %v484 = vpop.f32.mrb[0].mxu0
  %v485 = vadd.f32 %v369, %v484
  %v486 = vpop.f32.mrb[0].mxu0
  %487 = vmatprep.mubr.f32.mxu0 0.0
  %v488 = vand.u32 %v29, 4294901760
  %v489 = vsub.f32 %v29, %v488
  %v490 = vand.u32 %v489, 4294901760
  %491 = vmatmul.mubr.f32.gmra.mrb[0].mxu0 %v490
  %v492 = vpop.f32.mrb[0].mxu0
  %v493 = vadd.f32 %v376, %v492
  %v494 = vpop.f32.mrb[0].mxu0
  %495 = vmatprep.mubr.f32.mxu0 0.0
  %v496 = vand.u32 %v32, 4294901760
  %v497 = vsub.f32 %v32, %v496
  %v498 = vand.u32 %v497, 4294901760
  %499 = vmatmul.mubr.f32.gmra.mrb[0].mxu0 %v498
  %v500 = vpop.f32.mrb[0].mxu0
  %v501 = vadd.f32 %v383, %v500
  %v502 = vpop.f32.mrb[0].mxu0
  %503 = vmatprep.mubr.f32.mxu0 0.0
  %v504 = vand.u32 %v35, 4294901760
  %v505 = vsub.f32 %v35, %v504
  %v506 = vand.u32 %v505, 4294901760
  %507 = vmatmul.mubr.f32.gmra.mrb[0].mxu0 %v506
  %v508 = vpop.f32.mrb[0].mxu0
  %v509 = vadd.f32 %v390, %v508
  %v510 = vpop.f32.mrb[0].mxu0
  %511 = vmatprep.mubr.f32.mxu0 0.0
  %v512 = vand.u32 %v38, 4294901760
  %v513 = vsub.f32 %v38, %v512
  %v514 = vand.u32 %v513, 4294901760
  %515 = vmatmul.mubr.f32.gmra.mrb[0].mxu0 %v514
  %v516 = vpop.f32.mrb[0].mxu0
  %v517 = vadd.f32 %v397, %v516
  %v518 = vpop.f32.mrb[0].mxu0
  %519 = vmatprep.mubr.f32.mxu0 0.0
  %v520 = vand.u32 %v41, 4294901760
  %v521 = vsub.f32 %v41, %v520
  %v522 = vand.u32 %v521, 4294901760
  %523 = vmatmul.mubr.f32.gmra.mrb[0].mxu0 %v522
  %v524 = vpop.f32.mrb[0].mxu0
  %v525 = vadd.f32 %v404, %v524
  %v526 = vpop.f32.mrb[0].mxu0
  %527 = vmatprep.mubr.f32.mxu0 0.0
  %v528 = vand.u32 %v44, 4294901760
  %v529 = vsub.f32 %v44, %v528
  %v530 = vand.u32 %v529, 4294901760
  %531 = vmatmul.mubr.f32.gmra.mrb[0].mxu0 %v530
  %v532 = vpop.f32.mrb[0].mxu0
  %v533 = vadd.f32 %v411, %v532
  %v534 = vpop.f32.mrb[0].mxu0
  %535 = vdwg.mxu0
  %536 = vmatprep.subr.mxu0 0.0
  %v537 = vand.u32 %v48, 4294901760
  %v538 = vsub.f32 %v48, %v537
  %v539 = vand.u32 %v538, 4294901760
  %540 = vmatpush1.msra.mxu0 %v539
  %541 = vmatprep.subr.mxu0 0.0
  %542 = vmatpush1.msra.mxu0 0.0
  %543 = vmatprep.subr.mxu0 0.0
  %544 = vmatpush1.msra.mxu0 0.0
  %545 = vmatprep.subr.mxu0 0.0
  %546 = vmatpush1.msra.mxu0 0.0
  %547 = vmatprep.subr.mxu0 0.0
  %548 = vmatpush1.msra.mxu0 0.0
  %549 = vmatprep.subr.mxu0 0.0
  %550 = vmatpush1.msra.mxu0 0.0
  %551 = vmatprep.subr.mxu0 0.0
  %552 = vmatpush1.msra.mxu0 0.0
  %553 = vmatprep.subr.mxu0 0.0
  %554 = vmatpush1.msra.mxu0 0.0
  %555 = vmatprep.subr.mxu0 0.0
  %556 = vmatpush1.msra.mxu0 0.0
  %557 = vmatprep.subr.mxu0 0.0
  %558 = vmatpush1.msra.mxu0 0.0
  %559 = vmatprep.subr.mxu0 0.0
  %560 = vmatpush1.msra.mxu0 0.0
  %561 = vmatprep.subr.mxu0 0.0
  %562 = vmatpush1.msra.mxu0 0.0
  %563 = vmatprep.subr.mxu0 0.0
  %564 = vmatpush1.msra.mxu0 0.0
  %565 = vmatprep.subr.mxu0 0.0
  %566 = vmatpush1.msra.mxu0 0.0
  %567 = vmatprep.subr.mxu0 0.0
  %568 = vmatpush1.msra.mxu0 0.0
  %569 = vmatprep.subr.mxu0 0.0
  %570 = vmatpush1.msra.mxu0 0.0
  %571 = vmatprep.subr.mxu0 0.0
  %572 = vmatpush1.msra.mxu0 0.0
  %573 = vmatprep.subr.mxu0 0.0
  %574 = vmatpush1.msra.mxu0 0.0
  %575 = vmatprep.subr.mxu0 0.0
  %576 = vmatpush1.msra.mxu0 0.0
  %577 = vmatprep.subr.mxu0 0.0
  %578 = vmatpush1.msra.mxu0 0.0
  %579 = vmatprep.subr.mxu0 0.0
  %580 = vmatpush1.msra.mxu0 0.0
  %581 = vmatprep.subr.mxu0 0.0
  %582 = vmatpush1.msra.mxu0 0.0
  %583 = vmatprep.subr.mxu0 0.0
  %584 = vmatpush1.msra.mxu0 0.0
  %585 = vmatprep.subr.mxu0 0.0
  %586 = vmatpush1.msra.mxu0 0.0
  %587 = vmatprep.subr.mxu0 0.0
  %588 = vmatpush1.msra.mxu0 0.0
  %589 = vmatprep.subr.mxu0 0.0
  %590 = vmatpush1.msra.mxu0 0.0
  %591 = vmatprep.subr.mxu0 0.0
  %592 = vmatpush1.msra.mxu0 0.0
  %593 = vmatprep.subr.mxu0 0.0
  %594 = vmatpush1.msra.mxu0 0.0
  %595 = vmatprep.subr.mxu0 0.0
  %596 = vmatpush1.msra.mxu0 0.0
  %597 = vmatprep.subr.mxu0 0.0
  %598 = vmatpush1.msra.mxu0 0.0
  %599 = vmatprep.subr.mxu0 0.0
  %600 = vmatpush1.msra.mxu0 0.0
  %601 = vmatprep.subr.mxu0 0.0
  %602 = vmatpush1.msra.mxu0 0.0
  %603 = vmatprep.mubr.f32.mxu0 0.0
  %v604 = vand.u32 %v26, 4294901760
  %605 = vmatmul.mubr.f32.gmra.mrb[0].mxu0 %v604
  %v606 = vpop.f32.mrb[0].mxu0
  %v607 = vadd.f32 %v485, %v606
  %v608 = vpop.f32.mrb[0].mxu0
  %609 = vmatprep.mubr.f32.mxu0 0.0
  %v610 = vand.u32 %v29, 4294901760
  %611 = vmatmul.mubr.f32.gmra.mrb[0].mxu0 %v610
  %v612 = vpop.f32.mrb[0].mxu0
  %v613 = vadd.f32 %v493, %v612
  %v614 = vpop.f32.mrb[0].mxu0
  %615 = vmatprep.mubr.f32.mxu0 0.0
  %v616 = vand.u32 %v32, 4294901760
  %617 = vmatmul.mubr.f32.gmra.mrb[0].mxu0 %v616
  %v618 = vpop.f32.mrb[0].mxu0
  %v619 = vadd.f32 %v501, %v618
  %v620 = vpop.f32.mrb[0].mxu0
  %621 = vmatprep.mubr.f32.mxu0 0.0
  %v622 = vand.u32 %v35, 4294901760
  %623 = vmatmul.mubr.f32.gmra.mrb[0].mxu0 %v622
  %v624 = vpop.f32.mrb[0].mxu0
  %v625 = vadd.f32 %v509, %v624
  %v626 = vpop.f32.mrb[0].mxu0
  %627 = vmatprep.mubr.f32.mxu0 0.0
  %v628 = vand.u32 %v38, 4294901760
  %629 = vmatmul.mubr.f32.gmra.mrb[0].mxu0 %v628
  %v630 = vpop.f32.mrb[0].mxu0
  %v631 = vadd.f32 %v517, %v630
  %v632 = vpop.f32.mrb[0].mxu0
  %633 = vmatprep.mubr.f32.mxu0 0.0
  %v634 = vand.u32 %v41, 4294901760
  %635 = vmatmul.mubr.f32.gmra.mrb[0].mxu0 %v634
  %v636 = vpop.f32.mrb[0].mxu0
  %v637 = vadd.f32 %v525, %v636
  %v638 = vpop.f32.mrb[0].mxu0
  %639 = vmatprep.mubr.f32.mxu0 0.0
  %v640 = vand.u32 %v44, 4294901760
  %641 = vmatmul.mubr.f32.gmra.mrb[0].mxu0 %v640
  %v642 = vpop.f32.mrb[0].mxu0
  %v643 = vadd.f32 %v533, %v642
  %v644 = vpop.f32.mrb[0].mxu0
  %645 = vdwg.mxu0
  %646 = vmatprep.subr.mxu0 0.0
  %v647 = vand.u32 %v48, 4294901760
  %648 = vmatpush1.msra.mxu0 %v647
  %649 = vmatprep.subr.mxu0 0.0
  %650 = vmatpush1.msra.mxu0 0.0
  %651 = vmatprep.subr.mxu0 0.0
  %652 = vmatpush1.msra.mxu0 0.0
  %653 = vmatprep.subr.mxu0 0.0
  %654 = vmatpush1.msra.mxu0 0.0
  %655 = vmatprep.subr.mxu0 0.0
  %656 = vmatpush1.msra.mxu0 0.0
  %657 = vmatprep.subr.mxu0 0.0
  %658 = vmatpush1.msra.mxu0 0.0
  %659 = vmatprep.subr.mxu0 0.0
  %660 = vmatpush1.msra.mxu0 0.0
  %661 = vmatprep.subr.mxu0 0.0
  %662 = vmatpush1.msra.mxu0 0.0
  %663 = vmatprep.subr.mxu0 0.0
  %664 = vmatpush1.msra.mxu0 0.0
  %665 = vmatprep.subr.mxu0 0.0
  %666 = vmatpush1.msra.mxu0 0.0
  %667 = vmatprep.subr.mxu0 0.0
  %668 = vmatpush1.msra.mxu0 0.0
  %669 = vmatprep.subr.mxu0 0.0
  %670 = vmatpush1.msra.mxu0 0.0
  %671 = vmatprep.subr.mxu0 0.0
  %672 = vmatpush1.msra.mxu0 0.0
  %673 = vmatprep.subr.mxu0 0.0
  %674 = vmatpush1.msra.mxu0 0.0
  %675 = vmatprep.subr.mxu0 0.0
  %676 = vmatpush1.msra.mxu0 0.0
  %677 = vmatprep.subr.mxu0 0.0
  %678 = vmatpush1.msra.mxu0 0.0
  %679 = vmatprep.subr.mxu0 0.0
  %680 = vmatpush1.msra.mxu0 0.0
  %681 = vmatprep.subr.mxu0 0.0
  %682 = vmatpush1.msra.mxu0 0.0
  %683 = vmatprep.subr.mxu0 0.0
  %684 = vmatpush1.msra.mxu0 0.0
  %685 = vmatprep.subr.mxu0 0.0
  %686 = vmatpush1.msra.mxu0 0.0
  %687 = vmatprep.subr.mxu0 0.0
  %688 = vmatpush1.msra.mxu0 0.0
  %689 = vmatprep.subr.mxu0 0.0
  %690 = vmatpush1.msra.mxu0 0.0
  %691 = vmatprep.subr.mxu0 0.0
  %692 = vmatpush1.msra.mxu0 0.0
  %693 = vmatprep.subr.mxu0 0.0
  %694 = vmatpush1.msra.mxu0 0.0
  %695 = vmatprep.subr.mxu0 0.0
  %696 = vmatpush1.msra.mxu0 0.0
  %697 = vmatprep.subr.mxu0 0.0
  %698 = vmatpush1.msra.mxu0 0.0
  %699 = vmatprep.subr.mxu0 0.0
  %700 = vmatpush1.msra.mxu0 0.0
  %701 = vmatprep.subr.mxu0 0.0
  %702 = vmatpush1.msra.mxu0 0.0
  %703 = vmatprep.subr.mxu0 0.0
  %704 = vmatpush1.msra.mxu0 0.0
  %705 = vmatprep.subr.mxu0 0.0
  %706 = vmatpush1.msra.mxu0 0.0
  %707 = vmatprep.subr.mxu0 0.0
  %708 = vmatpush1.msra.mxu0 0.0
  %709 = vmatprep.subr.mxu0 0.0
  %710 = vmatpush1.msra.mxu0 0.0
  %711 = vmatprep.mubr.f32.mxu0 0.0
  %v712 = vand.u32 %v26, 4294901760
  %713 = vmatmul.mubr.f32.gmra.mrb[0].mxu0 %v712
  %v714 = vpop.f32.mrb[0].mxu0
  %v715 = vadd.f32 %v607, %v714
  %v716 = vpop.f32.mrb[0].mxu0
  %717 = vmatprep.mubr.f32.mxu0 0.0
  %v718 = vand.u32 %v29, 4294901760
  %719 = vmatmul.mubr.f32.gmra.mrb[0].mxu0 %v718
  %v720 = vpop.f32.mrb[0].mxu0
  %v721 = vadd.f32 %v613, %v720
  %v722 = vpop.f32.mrb[0].mxu0
  %723 = vmatprep.mubr.f32.mxu0 0.0
  %v724 = vand.u32 %v32, 4294901760
  %725 = vmatmul.mubr.f32.gmra.mrb[0].mxu0 %v724
  %v726 = vpop.f32.mrb[0].mxu0
  %v727 = vadd.f32 %v619, %v726
  %v728 = vpop.f32.mrb[0].mxu0
  %729 = vmatprep.mubr.f32.mxu0 0.0
  %v730 = vand.u32 %v35, 4294901760
  %731 = vmatmul.mubr.f32.gmra.mrb[0].mxu0 %v730
  %v732 = vpop.f32.mrb[0].mxu0
  %v733 = vadd.f32 %v625, %v732
  %v734 = vpop.f32.mrb[0].mxu0
  %735 = vmatprep.mubr.f32.mxu0 0.0
  %v736 = vand.u32 %v38, 4294901760
  %737 = vmatmul.mubr.f32.gmra.mrb[0].mxu0 %v736
  %v738 = vpop.f32.mrb[0].mxu0
  %v739 = vadd.f32 %v631, %v738
  %v740 = vpop.f32.mrb[0].mxu0
  %741 = vmatprep.mubr.f32.mxu0 0.0
  %v742 = vand.u32 %v41, 4294901760
  %743 = vmatmul.mubr.f32.gmra.mrb[0].mxu0 %v742
  %v744 = vpop.f32.mrb[0].mxu0
  %v745 = vadd.f32 %v637, %v744
  %v746 = vpop.f32.mrb[0].mxu0
  %747 = vmatprep.mubr.f32.mxu0 0.0
  %v748 = vand.u32 %v44, 4294901760
  %749 = vmatmul.mubr.f32.gmra.mrb[0].mxu0 %v748
  %v750 = vpop.f32.mrb[0].mxu0
  %v751 = vadd.f32 %v643, %v750
  %v752 = vpop.f32.mrb[0].mxu0
  %753 = vdwg.mxu0
  %v754 = vpack.c.bf16 %v721, %v715
  %v755 = vpack.c.bf16 %v733, %v727
  %v756 = vpack.c.bf16 %v745, %v739
  %v757 = vpack.c.bf16 %v751, %v751
  %v762 = vunpack.c.l.b16 %v754
  %v763 = vunpack.c.h.b16 %v754
  %v764 = vunpack.c.l.b16 %v755
  %v765 = vunpack.c.h.b16 %v755
  %v766 = vunpack.c.l.b16 %v756
  %v767 = vunpack.c.h.b16 %v756
  %v768 = vunpack.c.l.b16 %v757
  %v769 = vpack.c.b16 %v762, %v762
  %v770 = vpack.c.b16 %v763, %v763
  %v771 = vpack.c.b16 %v764, %v764
  %v772 = vpack.c.b16 %v765, %v765
  %v773 = vpack.c.b16 %v766, %v766
  %v774 = vpack.c.b16 %v767, %v767
  %v775 = vpack.c.b16 %v768, %v768
  %vm783 = vcmask 27648
  %784 = vst.msk [vmem:[%s3] sm:$0xf] %vm783, %v769
  %785 = vst.msk [vmem:[%s3 + $0x4] sm:$0xf] %vm783, %v770
  %786 = vst.msk [vmem:[%s3 + $0x8] sm:$0xf] %vm783, %v771
  %787 = vst.msk [vmem:[%s3 + $0xc] sm:$0xf] %vm783, %v772
  %788 = vst.msk [vmem:[%s3 + $0x10] sm:$0xf] %vm783, %v773
  %789 = vst.msk [vmem:[%s3 + $0x14] sm:$0xf] %vm783, %v774
  %vm790 = vcmask 25600
  %791 = vst.msk [vmem:[%s3 + $0x18] sm:$0x3] %vm790, %v775
  %v792 = vld [vmem:[%s2] sm:$0xf]
  %v794 = vsel %vm46, %v792, 0
  %796 = vmatprep.subr.mxu0 0.0
  %v797 = vand.u32 %v794, 4294901760
  %798 = vmatpush1.msra.mxu0 %v797
  %799 = vmatprep.subr.mxu0 0.0
  %800 = vmatpush1.msra.mxu0 0.0
  %801 = vmatprep.subr.mxu0 0.0
  %802 = vmatpush1.msra.mxu0 0.0
  %803 = vmatprep.subr.mxu0 0.0
  %804 = vmatpush1.msra.mxu0 0.0
  %805 = vmatprep.subr.mxu0 0.0
  %806 = vmatpush1.msra.mxu0 0.0
  %807 = vmatprep.subr.mxu0 0.0
  %808 = vmatpush1.msra.mxu0 0.0
  %809 = vmatprep.subr.mxu0 0.0
  %810 = vmatpush1.msra.mxu0 0.0
  %811 = vmatprep.subr.mxu0 0.0
  %812 = vmatpush1.msra.mxu0 0.0
  %813 = vmatprep.subr.mxu0 0.0
  %814 = vmatpush1.msra.mxu0 0.0
  %815 = vmatprep.subr.mxu0 0.0
  %816 = vmatpush1.msra.mxu0 0.0
  %817 = vmatprep.subr.mxu0 0.0
  %818 = vmatpush1.msra.mxu0 0.0
  %819 = vmatprep.subr.mxu0 0.0
  %820 = vmatpush1.msra.mxu0 0.0
  %821 = vmatprep.subr.mxu0 0.0
  %822 = vmatpush1.msra.mxu0 0.0
  %823 = vmatprep.subr.mxu0 0.0
  %824 = vmatpush1.msra.mxu0 0.0
  %825 = vmatprep.subr.mxu0 0.0
  %826 = vmatpush1.msra.mxu0 0.0
  %827 = vmatprep.subr.mxu0 0.0
  %828 = vmatpush1.msra.mxu0 0.0
  %829 = vmatprep.subr.mxu0 0.0
  %830 = vmatpush1.msra.mxu0 0.0
  %831 = vmatprep.subr.mxu0 0.0
  %832 = vmatpush1.msra.mxu0 0.0
  %833 = vmatprep.subr.mxu0 0.0
  %834 = vmatpush1.msra.mxu0 0.0
  %835 = vmatprep.subr.mxu0 0.0
  %836 = vmatpush1.msra.mxu0 0.0
  %837 = vmatprep.subr.mxu0 0.0
  %838 = vmatpush1.msra.mxu0 0.0
  %839 = vmatprep.subr.mxu0 0.0
  %840 = vmatpush1.msra.mxu0 0.0
  %841 = vmatprep.subr.mxu0 0.0
  %842 = vmatpush1.msra.mxu0 0.0
  %843 = vmatprep.subr.mxu0 0.0
  %844 = vmatpush1.msra.mxu0 0.0
  %845 = vmatprep.subr.mxu0 0.0
  %846 = vmatpush1.msra.mxu0 0.0
  %847 = vmatprep.subr.mxu0 0.0
  %848 = vmatpush1.msra.mxu0 0.0
  %849 = vmatprep.subr.mxu0 0.0
  %850 = vmatpush1.msra.mxu0 0.0
  %851 = vmatprep.subr.mxu0 0.0
  %852 = vmatpush1.msra.mxu0 0.0
  %853 = vmatprep.subr.mxu0 0.0
  %854 = vmatpush1.msra.mxu0 0.0
  %855 = vmatprep.subr.mxu0 0.0
  %856 = vmatpush1.msra.mxu0 0.0
  %857 = vmatprep.subr.mxu0 0.0
  %858 = vmatpush1.msra.mxu0 0.0
  %859 = vmatprep.subr.mxu0 0.0
  %860 = vmatpush1.msra.mxu0 0.0
  %861 = vmatprep.mubr.f32.mxu0 0.0
  %v862 = vand.u32 %v26, 4294901760
  %v863 = vsub.f32 %v26, %v862
  %v864 = vand.u32 %v863, 4294901760
  %v865 = vsub.f32 %v863, %v864
  %v866 = vand.u32 %v865, 4294901760
  %867 = vmatmul.mubr.f32.gmra.mrb[0].mxu0 %v866
  %v868 = vpop.f32.mrb[0].mxu0
  %v869 = vadd.f32 0.0, %v868
  %v870 = vpop.f32.mrb[0].mxu0
  %871 = vmatprep.mubr.f32.mxu0 0.0
  %v872 = vand.u32 %v29, 4294901760
  %v873 = vsub.f32 %v29, %v872
  %v874 = vand.u32 %v873, 4294901760
  %v875 = vsub.f32 %v873, %v874
  %v876 = vand.u32 %v875, 4294901760
  %877 = vmatmul.mubr.f32.gmra.mrb[0].mxu0 %v876
  %v878 = vpop.f32.mrb[0].mxu0
  %v879 = vadd.f32 0.0, %v878
  %v880 = vpop.f32.mrb[0].mxu0
  %881 = vmatprep.mubr.f32.mxu0 0.0
  %v882 = vand.u32 %v32, 4294901760
  %v883 = vsub.f32 %v32, %v882
  %v884 = vand.u32 %v883, 4294901760
  %v885 = vsub.f32 %v883, %v884
  %v886 = vand.u32 %v885, 4294901760
  %887 = vmatmul.mubr.f32.gmra.mrb[0].mxu0 %v886
  %v888 = vpop.f32.mrb[0].mxu0
  %v889 = vadd.f32 0.0, %v888
  %v890 = vpop.f32.mrb[0].mxu0
  %891 = vmatprep.mubr.f32.mxu0 0.0
  %v892 = vand.u32 %v35, 4294901760
  %v893 = vsub.f32 %v35, %v892
  %v894 = vand.u32 %v893, 4294901760
  %v895 = vsub.f32 %v893, %v894
  %v896 = vand.u32 %v895, 4294901760
  %897 = vmatmul.mubr.f32.gmra.mrb[0].mxu0 %v896
  %v898 = vpop.f32.mrb[0].mxu0
  %v899 = vadd.f32 0.0, %v898
  %v900 = vpop.f32.mrb[0].mxu0
  %901 = vmatprep.mubr.f32.mxu0 0.0
  %v902 = vand.u32 %v38, 4294901760
  %v903 = vsub.f32 %v38, %v902
  %v904 = vand.u32 %v903, 4294901760
  %v905 = vsub.f32 %v903, %v904
  %v906 = vand.u32 %v905, 4294901760
  %907 = vmatmul.mubr.f32.gmra.mrb[0].mxu0 %v906
  %v908 = vpop.f32.mrb[0].mxu0
  %v909 = vadd.f32 0.0, %v908
  %v910 = vpop.f32.mrb[0].mxu0
  %911 = vmatprep.mubr.f32.mxu0 0.0
  %v912 = vand.u32 %v41, 4294901760
  %v913 = vsub.f32 %v41, %v912
  %v914 = vand.u32 %v913, 4294901760
  %v915 = vsub.f32 %v913, %v914
  %v916 = vand.u32 %v915, 4294901760
  %917 = vmatmul.mubr.f32.gmra.mrb[0].mxu0 %v916
  %v918 = vpop.f32.mrb[0].mxu0
  %v919 = vadd.f32 0.0, %v918
  %v920 = vpop.f32.mrb[0].mxu0
  %921 = vmatprep.mubr.f32.mxu0 0.0
  %v922 = vand.u32 %v44, 4294901760
  %v923 = vsub.f32 %v44, %v922
  %v924 = vand.u32 %v923, 4294901760
  %v925 = vsub.f32 %v923, %v924
  %v926 = vand.u32 %v925, 4294901760
  %927 = vmatmul.mubr.f32.gmra.mrb[0].mxu0 %v926
  %v928 = vpop.f32.mrb[0].mxu0
  %v929 = vadd.f32 0.0, %v928
  %v930 = vpop.f32.mrb[0].mxu0
  %931 = vdwg.mxu0
  %932 = vmatprep.subr.mxu0 0.0
  %v933 = vand.u32 %v794, 4294901760
  %v934 = vsub.f32 %v794, %v933
  %v935 = vand.u32 %v934, 4294901760
  %v936 = vsub.f32 %v934, %v935
  %v937 = vand.u32 %v936, 4294901760
  %938 = vmatpush1.msra.mxu0 %v937
  %939 = vmatprep.subr.mxu0 0.0
  %940 = vmatpush1.msra.mxu0 0.0
  %941 = vmatprep.subr.mxu0 0.0
  %942 = vmatpush1.msra.mxu0 0.0
  %943 = vmatprep.subr.mxu0 0.0
  %944 = vmatpush1.msra.mxu0 0.0
  %945 = vmatprep.subr.mxu0 0.0
  %946 = vmatpush1.msra.mxu0 0.0
  %947 = vmatprep.subr.mxu0 0.0
  %948 = vmatpush1.msra.mxu0 0.0
  %949 = vmatprep.subr.mxu0 0.0
  %950 = vmatpush1.msra.mxu0 0.0
  %951 = vmatprep.subr.mxu0 0.0
  %952 = vmatpush1.msra.mxu0 0.0
  %953 = vmatprep.subr.mxu0 0.0
  %954 = vmatpush1.msra.mxu0 0.0
  %955 = vmatprep.subr.mxu0 0.0
  %956 = vmatpush1.msra.mxu0 0.0
  %957 = vmatprep.subr.mxu0 0.0
  %958 = vmatpush1.msra.mxu0 0.0
  %959 = vmatprep.subr.mxu0 0.0
  %960 = vmatpush1.msra.mxu0 0.0
  %961 = vmatprep.subr.mxu0 0.0
  %962 = vmatpush1.msra.mxu0 0.0
  %963 = vmatprep.subr.mxu0 0.0
  %964 = vmatpush1.msra.mxu0 0.0
  %965 = vmatprep.subr.mxu0 0.0
  %966 = vmatpush1.msra.mxu0 0.0
  %967 = vmatprep.subr.mxu0 0.0
  %968 = vmatpush1.msra.mxu0 0.0
  %969 = vmatprep.subr.mxu0 0.0
  %970 = vmatpush1.msra.mxu0 0.0
  %971 = vmatprep.subr.mxu0 0.0
  %972 = vmatpush1.msra.mxu0 0.0
  %973 = vmatprep.subr.mxu0 0.0
  %974 = vmatpush1.msra.mxu0 0.0
  %975 = vmatprep.subr.mxu0 0.0
  %976 = vmatpush1.msra.mxu0 0.0
  %977 = vmatprep.subr.mxu0 0.0
  %978 = vmatpush1.msra.mxu0 0.0
  %979 = vmatprep.subr.mxu0 0.0
  %980 = vmatpush1.msra.mxu0 0.0
  %981 = vmatprep.subr.mxu0 0.0
  %982 = vmatpush1.msra.mxu0 0.0
  %983 = vmatprep.subr.mxu0 0.0
  %984 = vmatpush1.msra.mxu0 0.0
  %985 = vmatprep.subr.mxu0 0.0
  %986 = vmatpush1.msra.mxu0 0.0
  %987 = vmatprep.subr.mxu0 0.0
  %988 = vmatpush1.msra.mxu0 0.0
  %989 = vmatprep.subr.mxu0 0.0
  %990 = vmatpush1.msra.mxu0 0.0
  %991 = vmatprep.subr.mxu0 0.0
  %992 = vmatpush1.msra.mxu0 0.0
  %993 = vmatprep.subr.mxu0 0.0
  %994 = vmatpush1.msra.mxu0 0.0
  %995 = vmatprep.subr.mxu0 0.0
  %996 = vmatpush1.msra.mxu0 0.0
  %997 = vmatprep.subr.mxu0 0.0
  %998 = vmatpush1.msra.mxu0 0.0
  %999 = vmatprep.subr.mxu0 0.0
  %1000 = vmatpush1.msra.mxu0 0.0
  %1001 = vmatprep.mubr.f32.mxu0 0.0
  %v1002 = vand.u32 %v26, 4294901760
  %1003 = vmatmul.mubr.f32.gmra.mrb[0].mxu0 %v1002
  %v1004 = vpop.f32.mrb[0].mxu0
  %v1005 = vadd.f32 %v869, %v1004
  %v1006 = vpop.f32.mrb[0].mxu0
  %1007 = vmatprep.mubr.f32.mxu0 0.0
  %v1008 = vand.u32 %v29, 4294901760
  %1009 = vmatmul.mubr.f32.gmra.mrb[0].mxu0 %v1008
  %v1010 = vpop.f32.mrb[0].mxu0
  %v1011 = vadd.f32 %v879, %v1010
  %v1012 = vpop.f32.mrb[0].mxu0
  %1013 = vmatprep.mubr.f32.mxu0 0.0
  %v1014 = vand.u32 %v32, 4294901760
  %1015 = vmatmul.mubr.f32.gmra.mrb[0].mxu0 %v1014
  %v1016 = vpop.f32.mrb[0].mxu0
  %v1017 = vadd.f32 %v889, %v1016
  %v1018 = vpop.f32.mrb[0].mxu0
  %1019 = vmatprep.mubr.f32.mxu0 0.0
  %v1020 = vand.u32 %v35, 4294901760
  %1021 = vmatmul.mubr.f32.gmra.mrb[0].mxu0 %v1020
  %v1022 = vpop.f32.mrb[0].mxu0
  %v1023 = vadd.f32 %v899, %v1022
  %v1024 = vpop.f32.mrb[0].mxu0
  %1025 = vmatprep.mubr.f32.mxu0 0.0
  %v1026 = vand.u32 %v38, 4294901760
  %1027 = vmatmul.mubr.f32.gmra.mrb[0].mxu0 %v1026
  %v1028 = vpop.f32.mrb[0].mxu0
  %v1029 = vadd.f32 %v909, %v1028
  %v1030 = vpop.f32.mrb[0].mxu0
  %1031 = vmatprep.mubr.f32.mxu0 0.0
  %v1032 = vand.u32 %v41, 4294901760
  %1033 = vmatmul.mubr.f32.gmra.mrb[0].mxu0 %v1032
  %v1034 = vpop.f32.mrb[0].mxu0
  %v1035 = vadd.f32 %v919, %v1034
  %v1036 = vpop.f32.mrb[0].mxu0
  %1037 = vmatprep.mubr.f32.mxu0 0.0
  %v1038 = vand.u32 %v44, 4294901760
  %1039 = vmatmul.mubr.f32.gmra.mrb[0].mxu0 %v1038
  %v1040 = vpop.f32.mrb[0].mxu0
  %v1041 = vadd.f32 %v929, %v1040
  %v1042 = vpop.f32.mrb[0].mxu0
  %1043 = vdwg.mxu0
  %1044 = vmatprep.subr.mxu0 0.0
  %v1045 = vand.u32 %v794, 4294901760
  %v1046 = vsub.f32 %v794, %v1045
  %1047 = vmatpush1.msra.mxu0 %v1046
  %1048 = vmatprep.subr.mxu0 0.0
  %1049 = vmatpush1.msra.mxu0 0.0
  %1050 = vmatprep.subr.mxu0 0.0
  %1051 = vmatpush1.msra.mxu0 0.0
  %1052 = vmatprep.subr.mxu0 0.0
  %1053 = vmatpush1.msra.mxu0 0.0
  %1054 = vmatprep.subr.mxu0 0.0
  %1055 = vmatpush1.msra.mxu0 0.0
  %1056 = vmatprep.subr.mxu0 0.0
  %1057 = vmatpush1.msra.mxu0 0.0
  %1058 = vmatprep.subr.mxu0 0.0
  %1059 = vmatpush1.msra.mxu0 0.0
  %1060 = vmatprep.subr.mxu0 0.0
  %1061 = vmatpush1.msra.mxu0 0.0
  %1062 = vmatprep.subr.mxu0 0.0
  %1063 = vmatpush1.msra.mxu0 0.0
  %1064 = vmatprep.subr.mxu0 0.0
  %1065 = vmatpush1.msra.mxu0 0.0
  %1066 = vmatprep.subr.mxu0 0.0
  %1067 = vmatpush1.msra.mxu0 0.0
  %1068 = vmatprep.subr.mxu0 0.0
  %1069 = vmatpush1.msra.mxu0 0.0
  %1070 = vmatprep.subr.mxu0 0.0
  %1071 = vmatpush1.msra.mxu0 0.0
  %1072 = vmatprep.subr.mxu0 0.0
  %1073 = vmatpush1.msra.mxu0 0.0
  %1074 = vmatprep.subr.mxu0 0.0
  %1075 = vmatpush1.msra.mxu0 0.0
  %1076 = vmatprep.subr.mxu0 0.0
  %1077 = vmatpush1.msra.mxu0 0.0
  %1078 = vmatprep.subr.mxu0 0.0
  %1079 = vmatpush1.msra.mxu0 0.0
  %1080 = vmatprep.subr.mxu0 0.0
  %1081 = vmatpush1.msra.mxu0 0.0
  %1082 = vmatprep.subr.mxu0 0.0
  %1083 = vmatpush1.msra.mxu0 0.0
  %1084 = vmatprep.subr.mxu0 0.0
  %1085 = vmatpush1.msra.mxu0 0.0
  %1086 = vmatprep.subr.mxu0 0.0
  %1087 = vmatpush1.msra.mxu0 0.0
  %1088 = vmatprep.subr.mxu0 0.0
  %1089 = vmatpush1.msra.mxu0 0.0
  %1090 = vmatprep.subr.mxu0 0.0
  %1091 = vmatpush1.msra.mxu0 0.0
  %1092 = vmatprep.subr.mxu0 0.0
  %1093 = vmatpush1.msra.mxu0 0.0
  %1094 = vmatprep.subr.mxu0 0.0
  %1095 = vmatpush1.msra.mxu0 0.0
  %1096 = vmatprep.subr.mxu0 0.0
  %1097 = vmatpush1.msra.mxu0 0.0
  %1098 = vmatprep.subr.mxu0 0.0
  %1099 = vmatpush1.msra.mxu0 0.0
  %1100 = vmatprep.subr.mxu0 0.0
  %1101 = vmatpush1.msra.mxu0 0.0
  %1102 = vmatprep.subr.mxu0 0.0
  %1103 = vmatpush1.msra.mxu0 0.0
  %1104 = vmatprep.subr.mxu0 0.0
  %1105 = vmatpush1.msra.mxu0 0.0
  %1106 = vmatprep.subr.mxu0 0.0
  %1107 = vmatpush1.msra.mxu0 0.0
  %1108 = vmatprep.subr.mxu0 0.0
  %1109 = vmatpush1.msra.mxu0 0.0
  %1110 = vmatprep.mubr.f32.mxu0 0.0
  %v1111 = vand.u32 %v26, 4294901760
  %v1112 = vsub.f32 %v26, %v1111
  %1113 = vmatmul.mubr.f32.gmra.mrb[0].mxu0 %v1112
  %v1114 = vpop.f32.mrb[0].mxu0
  %v1115 = vadd.f32 %v1005, %v1114
  %v1116 = vpop.f32.mrb[0].mxu0
  %1117 = vmatprep.mubr.f32.mxu0 0.0
  %v1118 = vand.u32 %v29, 4294901760
  %v1119 = vsub.f32 %v29, %v1118
  %1120 = vmatmul.mubr.f32.gmra.mrb[0].mxu0 %v1119
  %v1121 = vpop.f32.mrb[0].mxu0
  %v1122 = vadd.f32 %v1011, %v1121
  %v1123 = vpop.f32.mrb[0].mxu0
  %1124 = vmatprep.mubr.f32.mxu0 0.0
  %v1125 = vand.u32 %v32, 4294901760
  %v1126 = vsub.f32 %v32, %v1125
  %1127 = vmatmul.mubr.f32.gmra.mrb[0].mxu0 %v1126
  %v1128 = vpop.f32.mrb[0].mxu0
  %v1129 = vadd.f32 %v1017, %v1128
  %v1130 = vpop.f32.mrb[0].mxu0
  %1131 = vmatprep.mubr.f32.mxu0 0.0
  %v1132 = vand.u32 %v35, 4294901760
  %v1133 = vsub.f32 %v35, %v1132
  %1134 = vmatmul.mubr.f32.gmra.mrb[0].mxu0 %v1133
  %v1135 = vpop.f32.mrb[0].mxu0
  %v1136 = vadd.f32 %v1023, %v1135
  %v1137 = vpop.f32.mrb[0].mxu0
  %1138 = vmatprep.mubr.f32.mxu0 0.0
  %v1139 = vand.u32 %v38, 4294901760
  %v1140 = vsub.f32 %v38, %v1139
  %1141 = vmatmul.mubr.f32.gmra.mrb[0].mxu0 %v1140
  %v1142 = vpop.f32.mrb[0].mxu0
  %v1143 = vadd.f32 %v1029, %v1142
  %v1144 = vpop.f32.mrb[0].mxu0
  %1145 = vmatprep.mubr.f32.mxu0 0.0
  %v1146 = vand.u32 %v41, 4294901760
  %v1147 = vsub.f32 %v41, %v1146
  %1148 = vmatmul.mubr.f32.gmra.mrb[0].mxu0 %v1147
  %v1149 = vpop.f32.mrb[0].mxu0
  %v1150 = vadd.f32 %v1035, %v1149
  %v1151 = vpop.f32.mrb[0].mxu0
  %1152 = vmatprep.mubr.f32.mxu0 0.0
  %v1153 = vand.u32 %v44, 4294901760
  %v1154 = vsub.f32 %v44, %v1153
  %1155 = vmatmul.mubr.f32.gmra.mrb[0].mxu0 %v1154
  %v1156 = vpop.f32.mrb[0].mxu0
  %v1157 = vadd.f32 %v1041, %v1156
  %v1158 = vpop.f32.mrb[0].mxu0
  %1159 = vdwg.mxu0
  %1160 = vmatprep.subr.mxu0 0.0
  %v1161 = vand.u32 %v794, 4294901760
  %1162 = vmatpush1.msra.mxu0 %v1161
  %1163 = vmatprep.subr.mxu0 0.0
  %1164 = vmatpush1.msra.mxu0 0.0
  %1165 = vmatprep.subr.mxu0 0.0
  %1166 = vmatpush1.msra.mxu0 0.0
  %1167 = vmatprep.subr.mxu0 0.0
  %1168 = vmatpush1.msra.mxu0 0.0
  %1169 = vmatprep.subr.mxu0 0.0
  %1170 = vmatpush1.msra.mxu0 0.0
  %1171 = vmatprep.subr.mxu0 0.0
  %1172 = vmatpush1.msra.mxu0 0.0
  %1173 = vmatprep.subr.mxu0 0.0
  %1174 = vmatpush1.msra.mxu0 0.0
  %1175 = vmatprep.subr.mxu0 0.0
  %1176 = vmatpush1.msra.mxu0 0.0
  %1177 = vmatprep.subr.mxu0 0.0
  %1178 = vmatpush1.msra.mxu0 0.0
  %1179 = vmatprep.subr.mxu0 0.0
  %1180 = vmatpush1.msra.mxu0 0.0
  %1181 = vmatprep.subr.mxu0 0.0
  %1182 = vmatpush1.msra.mxu0 0.0
  %1183 = vmatprep.subr.mxu0 0.0
  %1184 = vmatpush1.msra.mxu0 0.0
  %1185 = vmatprep.subr.mxu0 0.0
  %1186 = vmatpush1.msra.mxu0 0.0
  %1187 = vmatprep.subr.mxu0 0.0
  %1188 = vmatpush1.msra.mxu0 0.0
  %1189 = vmatprep.subr.mxu0 0.0
  %1190 = vmatpush1.msra.mxu0 0.0
  %1191 = vmatprep.subr.mxu0 0.0
  %1192 = vmatpush1.msra.mxu0 0.0
  %1193 = vmatprep.subr.mxu0 0.0
  %1194 = vmatpush1.msra.mxu0 0.0
  %1195 = vmatprep.subr.mxu0 0.0
  %1196 = vmatpush1.msra.mxu0 0.0
  %1197 = vmatprep.subr.mxu0 0.0
  %1198 = vmatpush1.msra.mxu0 0.0
  %1199 = vmatprep.subr.mxu0 0.0
  %1200 = vmatpush1.msra.mxu0 0.0
  %1201 = vmatprep.subr.mxu0 0.0
  %1202 = vmatpush1.msra.mxu0 0.0
  %1203 = vmatprep.subr.mxu0 0.0
  %1204 = vmatpush1.msra.mxu0 0.0
  %1205 = vmatprep.subr.mxu0 0.0
  %1206 = vmatpush1.msra.mxu0 0.0
  %1207 = vmatprep.subr.mxu0 0.0
  %1208 = vmatpush1.msra.mxu0 0.0
  %1209 = vmatprep.subr.mxu0 0.0
  %1210 = vmatpush1.msra.mxu0 0.0
  %1211 = vmatprep.subr.mxu0 0.0
  %1212 = vmatpush1.msra.mxu0 0.0
  %1213 = vmatprep.subr.mxu0 0.0
  %1214 = vmatpush1.msra.mxu0 0.0
  %1215 = vmatprep.subr.mxu0 0.0
  %1216 = vmatpush1.msra.mxu0 0.0
  %1217 = vmatprep.subr.mxu0 0.0
  %1218 = vmatpush1.msra.mxu0 0.0
  %1219 = vmatprep.subr.mxu0 0.0
  %1220 = vmatpush1.msra.mxu0 0.0
  %1221 = vmatprep.subr.mxu0 0.0
  %1222 = vmatpush1.msra.mxu0 0.0
  %1223 = vmatprep.subr.mxu0 0.0
  %1224 = vmatpush1.msra.mxu0 0.0
  %1225 = vmatprep.mubr.f32.mxu0 0.0
  %v1226 = vand.u32 %v26, 4294901760
  %v1227 = vsub.f32 %v26, %v1226
  %v1228 = vand.u32 %v1227, 4294901760
  %1229 = vmatmul.mubr.f32.gmra.mrb[0].mxu0 %v1228
  %v1230 = vpop.f32.mrb[0].mxu0
  %v1231 = vadd.f32 %v1115, %v1230
  %v1232 = vpop.f32.mrb[0].mxu0
  %1233 = vmatprep.mubr.f32.mxu0 0.0
  %v1234 = vand.u32 %v29, 4294901760
  %v1235 = vsub.f32 %v29, %v1234
  %v1236 = vand.u32 %v1235, 4294901760
  %1237 = vmatmul.mubr.f32.gmra.mrb[0].mxu0 %v1236
  %v1238 = vpop.f32.mrb[0].mxu0
  %v1239 = vadd.f32 %v1122, %v1238
  %v1240 = vpop.f32.mrb[0].mxu0
  %1241 = vmatprep.mubr.f32.mxu0 0.0
  %v1242 = vand.u32 %v32, 4294901760
  %v1243 = vsub.f32 %v32, %v1242
  %v1244 = vand.u32 %v1243, 4294901760
  %1245 = vmatmul.mubr.f32.gmra.mrb[0].mxu0 %v1244
  %v1246 = vpop.f32.mrb[0].mxu0
  %v1247 = vadd.f32 %v1129, %v1246
  %v1248 = vpop.f32.mrb[0].mxu0
  %1249 = vmatprep.mubr.f32.mxu0 0.0
  %v1250 = vand.u32 %v35, 4294901760
  %v1251 = vsub.f32 %v35, %v1250
  %v1252 = vand.u32 %v1251, 4294901760
  %1253 = vmatmul.mubr.f32.gmra.mrb[0].mxu0 %v1252
  %v1254 = vpop.f32.mrb[0].mxu0
  %v1255 = vadd.f32 %v1136, %v1254
  %v1256 = vpop.f32.mrb[0].mxu0
  %1257 = vmatprep.mubr.f32.mxu0 0.0
  %v1258 = vand.u32 %v38, 4294901760
  %v1259 = vsub.f32 %v38, %v1258
  %v1260 = vand.u32 %v1259, 4294901760
  %1261 = vmatmul.mubr.f32.gmra.mrb[0].mxu0 %v1260
  %v1262 = vpop.f32.mrb[0].mxu0
  %v1263 = vadd.f32 %v1143, %v1262
  %v1264 = vpop.f32.mrb[0].mxu0
  %1265 = vmatprep.mubr.f32.mxu0 0.0
  %v1266 = vand.u32 %v41, 4294901760
  %v1267 = vsub.f32 %v41, %v1266
  %v1268 = vand.u32 %v1267, 4294901760
  %1269 = vmatmul.mubr.f32.gmra.mrb[0].mxu0 %v1268
  %v1270 = vpop.f32.mrb[0].mxu0
  %v1271 = vadd.f32 %v1150, %v1270
  %v1272 = vpop.f32.mrb[0].mxu0
  %1273 = vmatprep.mubr.f32.mxu0 0.0
  %v1274 = vand.u32 %v44, 4294901760
  %v1275 = vsub.f32 %v44, %v1274
  %v1276 = vand.u32 %v1275, 4294901760
  %1277 = vmatmul.mubr.f32.gmra.mrb[0].mxu0 %v1276
  %v1278 = vpop.f32.mrb[0].mxu0
  %v1279 = vadd.f32 %v1157, %v1278
  %v1280 = vpop.f32.mrb[0].mxu0
  %1281 = vdwg.mxu0
  %1282 = vmatprep.subr.mxu0 0.0
  %v1283 = vand.u32 %v794, 4294901760
  %v1284 = vsub.f32 %v794, %v1283
  %v1285 = vand.u32 %v1284, 4294901760
  %1286 = vmatpush1.msra.mxu0 %v1285
  %1287 = vmatprep.subr.mxu0 0.0
  %1288 = vmatpush1.msra.mxu0 0.0
  %1289 = vmatprep.subr.mxu0 0.0
  %1290 = vmatpush1.msra.mxu0 0.0
  %1291 = vmatprep.subr.mxu0 0.0
  %1292 = vmatpush1.msra.mxu0 0.0
  %1293 = vmatprep.subr.mxu0 0.0
  %1294 = vmatpush1.msra.mxu0 0.0
  %1295 = vmatprep.subr.mxu0 0.0
  %1296 = vmatpush1.msra.mxu0 0.0
  %1297 = vmatprep.subr.mxu0 0.0
  %1298 = vmatpush1.msra.mxu0 0.0
  %1299 = vmatprep.subr.mxu0 0.0
  %1300 = vmatpush1.msra.mxu0 0.0
  %1301 = vmatprep.subr.mxu0 0.0
  %1302 = vmatpush1.msra.mxu0 0.0
  %1303 = vmatprep.subr.mxu0 0.0
  %1304 = vmatpush1.msra.mxu0 0.0
  %1305 = vmatprep.subr.mxu0 0.0
  %1306 = vmatpush1.msra.mxu0 0.0
  %1307 = vmatprep.subr.mxu0 0.0
  %1308 = vmatpush1.msra.mxu0 0.0
  %1309 = vmatprep.subr.mxu0 0.0
  %1310 = vmatpush1.msra.mxu0 0.0
  %1311 = vmatprep.subr.mxu0 0.0
  %1312 = vmatpush1.msra.mxu0 0.0
  %1313 = vmatprep.subr.mxu0 0.0
  %1314 = vmatpush1.msra.mxu0 0.0
  %1315 = vmatprep.subr.mxu0 0.0
  %1316 = vmatpush1.msra.mxu0 0.0
  %1317 = vmatprep.subr.mxu0 0.0
  %1318 = vmatpush1.msra.mxu0 0.0
  %1319 = vmatprep.subr.mxu0 0.0
  %1320 = vmatpush1.msra.mxu0 0.0
  %1321 = vmatprep.subr.mxu0 0.0
  %1322 = vmatpush1.msra.mxu0 0.0
  %1323 = vmatprep.subr.mxu0 0.0
  %1324 = vmatpush1.msra.mxu0 0.0
  %1325 = vmatprep.subr.mxu0 0.0
  %1326 = vmatpush1.msra.mxu0 0.0
  %1327 = vmatprep.subr.mxu0 0.0
  %1328 = vmatpush1.msra.mxu0 0.0
  %1329 = vmatprep.subr.mxu0 0.0
  %1330 = vmatpush1.msra.mxu0 0.0
  %1331 = vmatprep.subr.mxu0 0.0
  %1332 = vmatpush1.msra.mxu0 0.0
  %1333 = vmatprep.subr.mxu0 0.0
  %1334 = vmatpush1.msra.mxu0 0.0
  %1335 = vmatprep.subr.mxu0 0.0
  %1336 = vmatpush1.msra.mxu0 0.0
  %1337 = vmatprep.subr.mxu0 0.0
  %1338 = vmatpush1.msra.mxu0 0.0
  %1339 = vmatprep.subr.mxu0 0.0
  %1340 = vmatpush1.msra.mxu0 0.0
  %1341 = vmatprep.subr.mxu0 0.0
  %1342 = vmatpush1.msra.mxu0 0.0
  %1343 = vmatprep.subr.mxu0 0.0
  %1344 = vmatpush1.msra.mxu0 0.0
  %1345 = vmatprep.subr.mxu0 0.0
  %1346 = vmatpush1.msra.mxu0 0.0
  %1347 = vmatprep.subr.mxu0 0.0
  %1348 = vmatpush1.msra.mxu0 0.0
  %1349 = vmatprep.mubr.f32.mxu0 0.0
  %v1350 = vand.u32 %v26, 4294901760
  %1351 = vmatmul.mubr.f32.gmra.mrb[0].mxu0 %v1350
  %v1352 = vpop.f32.mrb[0].mxu0
  %v1353 = vadd.f32 %v1231, %v1352
  %v1354 = vpop.f32.mrb[0].mxu0
  %1355 = vmatprep.mubr.f32.mxu0 0.0
  %v1356 = vand.u32 %v29, 4294901760
  %1357 = vmatmul.mubr.f32.gmra.mrb[0].mxu0 %v1356
  %v1358 = vpop.f32.mrb[0].mxu0
  %v1359 = vadd.f32 %v1239, %v1358
  %v1360 = vpop.f32.mrb[0].mxu0
  %1361 = vmatprep.mubr.f32.mxu0 0.0
  %v1362 = vand.u32 %v32, 4294901760
  %1363 = vmatmul.mubr.f32.gmra.mrb[0].mxu0 %v1362
  %v1364 = vpop.f32.mrb[0].mxu0
  %v1365 = vadd.f32 %v1247, %v1364
  %v1366 = vpop.f32.mrb[0].mxu0
  %1367 = vmatprep.mubr.f32.mxu0 0.0
  %v1368 = vand.u32 %v35, 4294901760
  %1369 = vmatmul.mubr.f32.gmra.mrb[0].mxu0 %v1368
  %v1370 = vpop.f32.mrb[0].mxu0
  %v1371 = vadd.f32 %v1255, %v1370
  %v1372 = vpop.f32.mrb[0].mxu0
  %1373 = vmatprep.mubr.f32.mxu0 0.0
  %v1374 = vand.u32 %v38, 4294901760
  %1375 = vmatmul.mubr.f32.gmra.mrb[0].mxu0 %v1374
  %v1376 = vpop.f32.mrb[0].mxu0
  %v1377 = vadd.f32 %v1263, %v1376
  %v1378 = vpop.f32.mrb[0].mxu0
  %1379 = vmatprep.mubr.f32.mxu0 0.0
  %v1380 = vand.u32 %v41, 4294901760
  %1381 = vmatmul.mubr.f32.gmra.mrb[0].mxu0 %v1380
  %v1382 = vpop.f32.mrb[0].mxu0
  %v1383 = vadd.f32 %v1271, %v1382
  %v1384 = vpop.f32.mrb[0].mxu0
  %1385 = vmatprep.mubr.f32.mxu0 0.0
  %v1386 = vand.u32 %v44, 4294901760
  %1387 = vmatmul.mubr.f32.gmra.mrb[0].mxu0 %v1386
  %v1388 = vpop.f32.mrb[0].mxu0
  %v1389 = vadd.f32 %v1279, %v1388
  %v1390 = vpop.f32.mrb[0].mxu0
  %1391 = vdwg.mxu0
  %1392 = vmatprep.subr.mxu0 0.0
  %v1393 = vand.u32 %v794, 4294901760
  %1394 = vmatpush1.msra.mxu0 %v1393
  %1395 = vmatprep.subr.mxu0 0.0
  %1396 = vmatpush1.msra.mxu0 0.0
  %1397 = vmatprep.subr.mxu0 0.0
  %1398 = vmatpush1.msra.mxu0 0.0
  %1399 = vmatprep.subr.mxu0 0.0
  %1400 = vmatpush1.msra.mxu0 0.0
  %1401 = vmatprep.subr.mxu0 0.0
  %1402 = vmatpush1.msra.mxu0 0.0
  %1403 = vmatprep.subr.mxu0 0.0
  %1404 = vmatpush1.msra.mxu0 0.0
  %1405 = vmatprep.subr.mxu0 0.0
  %1406 = vmatpush1.msra.mxu0 0.0
  %1407 = vmatprep.subr.mxu0 0.0
  %1408 = vmatpush1.msra.mxu0 0.0
  %1409 = vmatprep.subr.mxu0 0.0
  %1410 = vmatpush1.msra.mxu0 0.0
  %1411 = vmatprep.subr.mxu0 0.0
  %1412 = vmatpush1.msra.mxu0 0.0
  %1413 = vmatprep.subr.mxu0 0.0
  %1414 = vmatpush1.msra.mxu0 0.0
  %1415 = vmatprep.subr.mxu0 0.0
  %1416 = vmatpush1.msra.mxu0 0.0
  %1417 = vmatprep.subr.mxu0 0.0
  %1418 = vmatpush1.msra.mxu0 0.0
  %1419 = vmatprep.subr.mxu0 0.0
  %1420 = vmatpush1.msra.mxu0 0.0
  %1421 = vmatprep.subr.mxu0 0.0
  %1422 = vmatpush1.msra.mxu0 0.0
  %1423 = vmatprep.subr.mxu0 0.0
  %1424 = vmatpush1.msra.mxu0 0.0
  %1425 = vmatprep.subr.mxu0 0.0
  %1426 = vmatpush1.msra.mxu0 0.0
  %1427 = vmatprep.subr.mxu0 0.0
  %1428 = vmatpush1.msra.mxu0 0.0
  %1429 = vmatprep.subr.mxu0 0.0
  %1430 = vmatpush1.msra.mxu0 0.0
  %1431 = vmatprep.subr.mxu0 0.0
  %1432 = vmatpush1.msra.mxu0 0.0
  %1433 = vmatprep.subr.mxu0 0.0
  %1434 = vmatpush1.msra.mxu0 0.0
  %1435 = vmatprep.subr.mxu0 0.0
  %1436 = vmatpush1.msra.mxu0 0.0
  %1437 = vmatprep.subr.mxu0 0.0
  %1438 = vmatpush1.msra.mxu0 0.0
  %1439 = vmatprep.subr.mxu0 0.0
  %1440 = vmatpush1.msra.mxu0 0.0
  %1441 = vmatprep.subr.mxu0 0.0
  %1442 = vmatpush1.msra.mxu0 0.0
  %1443 = vmatprep.subr.mxu0 0.0
  %1444 = vmatpush1.msra.mxu0 0.0
  %1445 = vmatprep.subr.mxu0 0.0
  %1446 = vmatpush1.msra.mxu0 0.0
  %1447 = vmatprep.subr.mxu0 0.0
  %1448 = vmatpush1.msra.mxu0 0.0
  %1449 = vmatprep.subr.mxu0 0.0
  %1450 = vmatpush1.msra.mxu0 0.0
  %1451 = vmatprep.subr.mxu0 0.0
  %1452 = vmatpush1.msra.mxu0 0.0
  %1453 = vmatprep.subr.mxu0 0.0
  %1454 = vmatpush1.msra.mxu0 0.0
  %1455 = vmatprep.subr.mxu0 0.0
  %1456 = vmatpush1.msra.mxu0 0.0
  %1457 = vmatprep.mubr.f32.mxu0 0.0
  %v1458 = vand.u32 %v26, 4294901760
  %1459 = vmatmul.mubr.f32.gmra.mrb[0].mxu0 %v1458
  %v1460 = vpop.f32.mrb[0].mxu0
  %v1461 = vadd.f32 %v1353, %v1460
  %v1462 = vpop.f32.mrb[0].mxu0
  %1463 = vmatprep.mubr.f32.mxu0 0.0
  %v1464 = vand.u32 %v29, 4294901760
  %1465 = vmatmul.mubr.f32.gmra.mrb[0].mxu0 %v1464
  %v1466 = vpop.f32.mrb[0].mxu0
  %v1467 = vadd.f32 %v1359, %v1466
  %v1468 = vpop.f32.mrb[0].mxu0
  %1469 = vmatprep.mubr.f32.mxu0 0.0
  %v1470 = vand.u32 %v32, 4294901760
  %1471 = vmatmul.mubr.f32.gmra.mrb[0].mxu0 %v1470
  %v1472 = vpop.f32.mrb[0].mxu0
  %v1473 = vadd.f32 %v1365, %v1472
  %v1474 = vpop.f32.mrb[0].mxu0
  %1475 = vmatprep.mubr.f32.mxu0 0.0
  %v1476 = vand.u32 %v35, 4294901760
  %1477 = vmatmul.mubr.f32.gmra.mrb[0].mxu0 %v1476
  %v1478 = vpop.f32.mrb[0].mxu0
  %v1479 = vadd.f32 %v1371, %v1478
  %v1480 = vpop.f32.mrb[0].mxu0
  %1481 = vmatprep.mubr.f32.mxu0 0.0
  %v1482 = vand.u32 %v38, 4294901760
  %1483 = vmatmul.mubr.f32.gmra.mrb[0].mxu0 %v1482
  %v1484 = vpop.f32.mrb[0].mxu0
  %v1485 = vadd.f32 %v1377, %v1484
  %v1486 = vpop.f32.mrb[0].mxu0
  %1487 = vmatprep.mubr.f32.mxu0 0.0
  %v1488 = vand.u32 %v41, 4294901760
  %1489 = vmatmul.mubr.f32.gmra.mrb[0].mxu0 %v1488
  %v1490 = vpop.f32.mrb[0].mxu0
  %v1491 = vadd.f32 %v1383, %v1490
  %v1492 = vpop.f32.mrb[0].mxu0
  %1493 = vmatprep.mubr.f32.mxu0 0.0
  %v1494 = vand.u32 %v44, 4294901760
  %1495 = vmatmul.mubr.f32.gmra.mrb[0].mxu0 %v1494
  %v1496 = vpop.f32.mrb[0].mxu0
  %v1497 = vadd.f32 %v1389, %v1496
  %v1498 = vpop.f32.mrb[0].mxu0
  %1499 = vdwg.mxu0
  %v1500 = vpack.c.bf16 %v1467, %v1461
  %v1501 = vpack.c.bf16 %v1479, %v1473
  %v1502 = vpack.c.bf16 %v1491, %v1485
  %v1503 = vpack.c.bf16 %v1497, %v1497
  %v1508 = vunpack.c.l.b16 %v1500
  %v1509 = vunpack.c.h.b16 %v1500
  %v1510 = vunpack.c.l.b16 %v1501
  %v1511 = vunpack.c.h.b16 %v1501
  %v1512 = vunpack.c.l.b16 %v1502
  %v1513 = vunpack.c.h.b16 %v1502
  %v1514 = vunpack.c.l.b16 %v1503
  %v1515 = vpack.c.b16 %v1508, %v1508
  %v1516 = vpack.c.b16 %v1509, %v1509
  %v1517 = vpack.c.b16 %v1510, %v1510
  %v1518 = vpack.c.b16 %v1511, %v1511
  %v1519 = vpack.c.b16 %v1512, %v1512
  %v1520 = vpack.c.b16 %v1513, %v1513
  %v1521 = vpack.c.b16 %v1514, %v1514
  %1529 = vst.msk [vmem:[%s4] sm:$0xf] %vm783, %v1515
  %1530 = vst.msk [vmem:[%s4 + $0x4] sm:$0xf] %vm783, %v1516
  %1531 = vst.msk [vmem:[%s4 + $0x8] sm:$0xf] %vm783, %v1517
  %1532 = vst.msk [vmem:[%s4 + $0xc] sm:$0xf] %vm783, %v1518
  %1533 = vst.msk [vmem:[%s4 + $0x10] sm:$0xf] %vm783, %v1519
  %1534 = vst.msk [vmem:[%s4 + $0x14] sm:$0xf] %vm783, %v1520
  %1535 = vst.msk [vmem:[%s4 + $0x18] sm:$0x3] %vm790, %v1521
  // Predicated region
  $region14: #{tpu_custom_call.1} parent=0 // pred_check
    _
  $region15: #{tpu_custom_call.1} parent=0 // pred_check_branch
    %1537 = sbr.rel (0) target = $region17
  $region16: #{tpu_custom_call.1} parent=0 // pred_region
    _
  $region17: #{tpu_custom_call.1} parent=0 // pred_fallthru
    _
  // Predicated region
  $region18: #{tpu_custom_call.1} parent=0 // pred_check
    _
  $region19: #{tpu_custom_call.1} parent=0 // pred_check_branch
    %1539 = sbr.rel (0) target = $region21
  $region20: #{tpu_custom_call.1} parent=0 // pred_region
    _
  $region21: #{tpu_custom_call.1} parent=0 // pred_fallthru
    _
  // Predicated region
  $region22: #{tpu_custom_call.1} parent=0 // pred_check
    _
  $region23: #{tpu_custom_call.1} parent=0 // pred_check_branch
    %1541 = sbr.rel (0) target = $region25
  $region24: #{tpu_custom_call.1} parent=0 // pred_region
    _
  $region25: #{tpu_custom_call.1} parent=0 // pred_fallthru
    _
  // Predicated region
  $region26: #{tpu_custom_call.1} parent=0 // pred_check
    _
  $region27: #{tpu_custom_call.1} parent=0 // pred_check_branch
    %1543 = sbr.rel (0) target = $region29
  $region28: #{tpu_custom_call.1} parent=0 // pred_region
    _
  $region29: #{tpu_custom_call.1} parent=0 // pred_fallthru
    _

</llo_original>
